<compile_context>
chip_gen: v5e
topology: v5e:2x2
jax: 0.10.0
libtpu: 0.0.40
codegen_flags: <defaults>
</compile_context>

<pallas_src>
import functools

import jax
import jax.numpy as jnp
from jax import lax
from jax.experimental import pallas as pl
from jax.experimental.pallas import tpu as pltpu


def _attention_kernel(x_ref, wq_ref, wk_ref, wv_ref, wp_ref, b_ref,
                      o_ref, acc_ref, *, q_tile, num_heads, compute_dtype,
                      approx_recip):
    """One (batch, q-tile) program; loops over heads internally.

      x_ref   : (N, C)      VMEM   full sequence of this batch element
      wq_ref  : (H, C, hd)  VMEM   per-head Q weights (softmax scale folded in)
      wk_ref  : (H, C, hd)  VMEM   per-head K weights
      wv_ref  : (H, C, hd)  VMEM   per-head V weights
      wp_ref  : (H, hd, C)  VMEM   proj-weight row slabs, one per head
      b_ref   : (1, C)      VMEM   proj bias
      o_ref   : (tq, C)     VMEM   output tile
      acc_ref : (tq, C)     f32 VMEM scratch, output-projection accumulator
    """
    n = x_ref.shape[0]

    xkv = x_ref[...].astype(compute_dtype)                 # (N, C)
    if q_tile == n:
        xq = xkv                                           # single q-tile case
    else:
        row0 = pl.multiple_of(pl.program_id(1) * q_tile, q_tile)
        xq = x_ref[pl.ds(row0, q_tile), :].astype(compute_dtype)   # (tq, C)

    # Initialize the accumulator with the (broadcast) projection bias.
    acc_ref[...] = jnp.broadcast_to(b_ref[...].astype(jnp.float32),
                                    acc_ref.shape)

    for h in range(num_heads):                             # static: free views
        # Per-head projections on the MXU (f32 accumulation).  Softmax scale
        # is pre-folded into wq on the host, so no (tq, N) VPU multiply.
        q = jnp.dot(xq, wq_ref[h], preferred_element_type=jnp.float32)   # (tq, hd)
        k = jnp.dot(xkv, wk_ref[h], preferred_element_type=jnp.float32)  # (N, hd)
        v = jnp.dot(xkv, wv_ref[h], preferred_element_type=jnp.float32)  # (N, hd)

        # Scores: contract hd of both operands -- no k^T materialization.
        s = lax.dot_general(
            q.astype(compute_dtype), k.astype(compute_dtype),
            dimension_numbers=(((1,), (1,)), ((), ())),
            preferred_element_type=jnp.float32)            # (tq, N)

        # Softmax statistics stay in f32.
        m = jnp.max(s, axis=-1, keepdims=True)             # (tq, 1)
        p = jnp.exp(s - m)                                 # un-normalized probs
        l = jnp.sum(p, axis=-1, keepdims=True)             # (tq, 1)

        # Un-normalized head output, then normalize the (tq, hd) output
        # (cheaper than dividing the (tq, N) prob matrix) via EUP reciprocal.
        ho = jnp.dot(p.astype(compute_dtype), v.astype(compute_dtype),
                     preferred_element_type=jnp.float32)   # (tq, hd)
        ho = ho * pl.reciprocal(l, approx=approx_recip)

        # Accumulate this head's contribution to the output projection.
        acc_ref[...] += jnp.dot(ho.astype(compute_dtype), wp_ref[h],
                                preferred_element_type=jnp.float32)  # (tq, C)

    o_ref[...] = acc_ref[...].astype(o_ref.dtype)


def attention_pallas(x, w_qkv, w_proj, b_proj, *, num_heads: int,
                     compute_dtype=None, q_tile=None):
    """x: (B, N, C); w_qkv: (C, 3C); w_proj: (C, C); b_proj: (1, C).

    Weights are stored as (in, out), i.e. the kernel computes x @ W
    (equivalent to PyTorch's x @ W.T with W of shape (out, in)).
    compute_dtype: dtype for MXU operands (e.g. jnp.bfloat16 on v6e/v7x);
    accumulation and softmax statistics are always f32.
    """
    B, N, C = x.shape
    H = num_heads
    hd = C // H
    scale = hd ** (-0.5)
    if compute_dtype is None:
        compute_dtype = x.dtype

    # (C, 3C) -> (3, H, C, hd), matching torch's reshape(B,N,3,H,hd) column
    # decomposition j = t*C + h*hd + d.  Fold the softmax scale into Q and
    # pre-cast to the compute dtype (weights are resident, fetched once).
    w = w_qkv.reshape(C, 3, H, hd).transpose(1, 2, 0, 3)   # (3, H, C, hd)
    wq = (w[0] * scale).astype(compute_dtype)              # (H, C, hd)
    wk = w[1].astype(compute_dtype)                        # (H, C, hd)
    wv = w[2].astype(compute_dtype)                        # (H, C, hd)
    # Rows h*hd:(h+1)*hd of the proj weight, one lane-dense (hd, C) slab/head.
    wp = w_proj.reshape(H, hd, C).astype(compute_dtype)    # (H, hd, C)
    bias = b_proj.reshape(1, C)

    # q-tile the sequence so VMEM stays bounded for long N (flash-style kv
    # tiling is not needed at these sizes; K/V for the full N stay resident).
    if q_tile is None:
        q_tile = N if N <= 256 else 128
    assert N % q_tile == 0, "q_tile must divide N"
    assert q_tile == N or q_tile % 8 == 0, "q_tile must be sublane-aligned"
    nq = N // q_tile
    # TODO(synk): masked final q-tile for N not divisible by the tile size.
    # TODO(synk): pad C to a multiple of 128 for lane-dense output stores when
    # the model dim is not already 128-aligned (real ViT dims 384/768/1024 are).

    kernel = functools.partial(
        _attention_kernel,
        q_tile=q_tile, num_heads=H,
        compute_dtype=compute_dtype,
        approx_recip=(compute_dtype != jnp.float32))

    # VMEM budget: resident (double-buffered) weights + pipelined x/out blocks.
    w_bytes = 4 * C * C * jnp.dtype(compute_dtype).itemsize
    x_bytes = N * C * jnp.dtype(x.dtype).itemsize
    o_bytes = q_tile * C * jnp.dtype(x.dtype).itemsize
    vmem_est = 2 * w_bytes + 2 * x_bytes + 2 * o_bytes + q_tile * C * 4 + (2 << 20)
    vmem_limit = max(32 * 1024 * 1024, int(vmem_est))

    return pl.pallas_call(
        kernel,
        out_shape=jax.ShapeDtypeStruct((B, N, C), x.dtype),
        grid=(B, nq),
        in_specs=[
            pl.BlockSpec((None, N, C), lambda b, qi: (b, 0, 0)),   # x (K/V + q rows)
            pl.BlockSpec((H, C, hd),   lambda b, qi: (0, 0, 0)),   # wq (scaled), resident
            pl.BlockSpec((H, C, hd),   lambda b, qi: (0, 0, 0)),   # wk, resident
            pl.BlockSpec((H, C, hd),   lambda b, qi: (0, 0, 0)),   # wv, resident
            pl.BlockSpec((H, hd, C),   lambda b, qi: (0, 0, 0)),   # proj rows, resident
            pl.BlockSpec((1, C),       lambda b, qi: (0, 0)),      # proj bias
        ],
        out_specs=pl.BlockSpec((None, q_tile, C), lambda b, qi: (b, qi, 0)),
        scratch_shapes=[pltpu.VMEM((q_tile, C), jnp.float32)],
        compiler_params=pltpu.CompilerParams(
            # Both grid axes are independent (shardable across TCs on v7x);
            # the head reduction lives inside the kernel body.
            dimension_semantics=("parallel", "parallel"),
            vmem_limit_bytes=vmem_limit),
    )(x, wq, wk, wv, wp, bias)


def attention_reference(x, w_qkv, w_proj, b_proj, *, num_heads: int):
    """Pure-JAX reference mirroring the PyTorch forward exactly."""
    B, N, C = x.shape
    hd = C // num_heads
    scale = hd ** (-0.5)
    qkv = x @ w_qkv                                                  # (B, N, 3C)
    qkv = qkv.reshape(B, N, 3, num_heads, hd).transpose(2, 0, 3, 1, 4)
    q, k, v = qkv[0], qkv[1], qkv[2]                                 # (B, H, N, hd)
    attn = (q @ jnp.swapaxes(k, -2, -1)) * scale                     # (B, H, N, N)
    attn = jax.nn.softmax(attn, axis=-1)
    out = (attn @ v).transpose(0, 2, 1, 3).reshape(B, N, C)          # (B, N, C)
    return out @ w_proj + b_proj[0]


if __name__ == "__main__":
    B, N, C = 2, 8, 32
    num_heads = 8

    key = jax.random.PRNGKey(0)
    kx, kq, kp, kb = jax.random.split(key, 4)

    # Deterministic synthetic parameters (qkv_bias=False, proj has bias).
    x = jax.random.normal(kx, (B, N, C), dtype=jnp.float32)
    w_qkv = jax.random.normal(kq, (C, 3 * C), dtype=jnp.float32) * 0.1
    w_proj = jax.random.normal(kp, (C, C), dtype=jnp.float32) * 0.1
    b_proj = jax.random.normal(kb, (1, C), dtype=jnp.float32) * 0.1

    ref = attention_reference(x, w_qkv, w_proj, b_proj, num_heads=num_heads)

    # f32 path: exact reciprocal, tight tolerance.
    out = attention_pallas(x, w_qkv, w_proj, b_proj, num_heads=num_heads)
    out = jax.block_until_ready(out)
    assert out.shape == (B, N, C)
    assert jnp.allclose(out, ref, atol=1e-4, rtol=1e-4), (
        f"f32 path: max abs diff = {jnp.max(jnp.abs(out - ref))}")

    # bf16 MXU fast path (v6e/v7x): f32 stats/accumulation, loose tolerance.
    out_bf16 = attention_pallas(x, w_qkv, w_proj, b_proj,
                                num_heads=num_heads,
                                compute_dtype=jnp.bfloat16)
    out_bf16 = jax.block_until_ready(out_bf16)
    assert jnp.allclose(out_bf16, ref, atol=1e-1, rtol=1e-1), (
        f"bf16 path: max abs diff = {jnp.max(jnp.abs(out_bf16 - ref))}")

    print("KERNEL_OK")
</pallas_src>

<mosaic_0001>
module attributes {stable_mosaic.version = 11 : i64} {
  func.func @_attention_kernel(%arg0: i32, %arg1: i32, %arg2: memref<1x8x32xf32, #tpu.memory_space<vmem>>, %arg3: memref<8x32x4xf32, #tpu.memory_space<vmem>>, %arg4: memref<8x32x4xf32, #tpu.memory_space<vmem>>, %arg5: memref<8x32x4xf32, #tpu.memory_space<vmem>>, %arg6: memref<8x4x32xf32, #tpu.memory_space<vmem>>, %arg7: memref<1x32xf32, #tpu.memory_space<vmem>>, %arg8: memref<1x8x32xf32, #tpu.memory_space<vmem>>, %arg9: memref<8x32xf32, #tpu.memory_space<vmem>>) attributes {dimension_semantics = [#tpu.dimension_semantics<parallel>, #tpu.dimension_semantics<parallel>], iteration_bounds = array<i64: 2, 1>, scalar_prefetch = 0 : i64, scratch_operands = 1 : i64, tpu.core_type = #tpu.core_type<tc>, window_params = [{transform_indices = @transform_0, window_bounds = array<i64: 1, 8, 32>}, {pipeline_mode = #tpu.pipeline_mode<synchronous>, transform_indices = @transform_1, window_bounds = array<i64: 8, 32, 4>}, {pipeline_mode = #tpu.pipeline_mode<synchronous>, transform_indices = @transform_2, window_bounds = array<i64: 8, 32, 4>}, {pipeline_mode = #tpu.pipeline_mode<synchronous>, transform_indices = @transform_3, window_bounds = array<i64: 8, 32, 4>}, {pipeline_mode = #tpu.pipeline_mode<synchronous>, transform_indices = @transform_4, window_bounds = array<i64: 8, 4, 32>}, {pipeline_mode = #tpu.pipeline_mode<synchronous>, transform_indices = @transform_5, window_bounds = array<i64: 1, 32>}, {transform_indices = @transform_6, window_bounds = array<i64: 1, 8, 32>}]} {
    %c0 = arith.constant 0 : index
    %c0_0 = arith.constant 0 : index
    %c0_1 = arith.constant 0 : index
    %0 = vector.load %arg2[%c0, %c0_0, %c0_1] : memref<1x8x32xf32, #tpu.memory_space<vmem>>, vector<1x8x32xf32>
    %1 = vector.shape_cast %0 : vector<1x8x32xf32> to vector<8x32xf32>
    %c0_2 = arith.constant 0 : index
    %c0_3 = arith.constant 0 : index
    %2 = vector.load %arg7[%c0_2, %c0_3] : memref<1x32xf32, #tpu.memory_space<vmem>>, vector<1x32xf32>
    %3 = vector.shape_cast %2 : vector<1x32xf32> to vector<1x32xf32>
    %4 = vector.broadcast %3 : vector<1x32xf32> to vector<8x32xf32>
    %c0_4 = arith.constant 0 : index
    %c0_5 = arith.constant 0 : index
    %5 = vector.load %arg9[%c0_4, %c0_5] : memref<8x32xf32, #tpu.memory_space<vmem>>, vector<8x32xf32>
    tpu.vector_store %arg9[%c0_4, %c0_5], %4 {strides = array<i32>} : memref<8x32xf32, #tpu.memory_space<vmem>>, vector<8x32xf32>,
    %c0_6 = arith.constant 0 : index
    %c0_7 = arith.constant 0 : index
    %c0_8 = arith.constant 0 : index
    %6 = vector.load %arg3[%c0_6, %c0_7, %c0_8] : memref<8x32x4xf32, #tpu.memory_space<vmem>>, vector<1x32x4xf32>
    %7 = vector.shape_cast %6 : vector<1x32x4xf32> to vector<32x4xf32>
    %cst = arith.constant dense<0.000000e+00> : vector<8x4xf32>
    %8 = tpu.matmul %1, %7, %cst {dimension_numbers = #tpu.dot_dimension_numbers<[1], [0], [0], [1], [0, 0, 1, 1], [], []>} : vector<8x32xf32>, vector<32x4xf32>, vector<8x4xf32> -> vector<8x4xf32>
    %c0_9 = arith.constant 0 : index
    %c0_10 = arith.constant 0 : index
    %c0_11 = arith.constant 0 : index
    %9 = vector.load %arg4[%c0_9, %c0_10, %c0_11] : memref<8x32x4xf32, #tpu.memory_space<vmem>>, vector<1x32x4xf32>
    %10 = vector.shape_cast %9 : vector<1x32x4xf32> to vector<32x4xf32>
    %cst_12 = arith.constant dense<0.000000e+00> : vector<8x4xf32>
    %11 = tpu.matmul %1, %10, %cst_12 {dimension_numbers = #tpu.dot_dimension_numbers<[1], [0], [0], [1], [0, 0, 1, 1], [], []>} : vector<8x32xf32>, vector<32x4xf32>, vector<8x4xf32> -> vector<8x4xf32>
    %c0_13 = arith.constant 0 : index
    %c0_14 = arith.constant 0 : index
    %c0_15 = arith.constant 0 : index
    %12 = vector.load %arg5[%c0_13, %c0_14, %c0_15] : memref<8x32x4xf32, #tpu.memory_space<vmem>>, vector<1x32x4xf32>
    %13 = vector.shape_cast %12 : vector<1x32x4xf32> to vector<32x4xf32>
    %cst_16 = arith.constant dense<0.000000e+00> : vector<8x4xf32>
    %14 = tpu.matmul %1, %13, %cst_16 {dimension_numbers = #tpu.dot_dimension_numbers<[1], [0], [0], [1], [0, 0, 1, 1], [], []>} : vector<8x32xf32>, vector<32x4xf32>, vector<8x4xf32> -> vector<8x4xf32>
    %cst_17 = arith.constant dense<0.000000e+00> : vector<8x8xf32>
    %15 = tpu.matmul %8, %11, %cst_17 {dimension_numbers = #tpu.dot_dimension_numbers<[1], [1], [0], [0], [0, 0, 1, 0], [], []>} : vector<8x4xf32>, vector<8x4xf32>, vector<8x8xf32> -> vector<8x8xf32>
    %cst_18 = arith.constant dense<0xFF800000> : vector<8xf32>
    %16 = vector.multi_reduction <maximumf>, %15, %cst_18 [1] : vector<8x8xf32> to vector<8xf32>
    %17 = vector.shape_cast %16 : vector<8xf32> to vector<8x1xf32>
    %18 = vector.broadcast %17 : vector<8x1xf32> to vector<8x8xf32>
    %19 = arith.subf %15, %18 : vector<8x8xf32>
    %20 = math.exp %19 : vector<8x8xf32>
    %cst_19 = arith.constant dense<0.000000e+00> : vector<8xf32>
    %21 = vector.multi_reduction <add>, %20, %cst_19 [1] : vector<8x8xf32> to vector<8xf32>
    %22 = vector.shape_cast %21 : vector<8xf32> to vector<8x1xf32>
    %cst_20 = arith.constant dense<0.000000e+00> : vector<8x4xf32>
    %23 = tpu.matmul %20, %14, %cst_20 {dimension_numbers = #tpu.dot_dimension_numbers<[1], [0], [0], [1], [0, 0, 1, 1], [], []>} : vector<8x8xf32>, vector<8x4xf32>, vector<8x4xf32> -> vector<8x4xf32>
    %24 = tpu.reciprocal %22 : vector<8x1xf32> -> vector<8x1xf32>
    %25 = vector.broadcast %24 : vector<8x1xf32> to vector<8x4xf32>
    %26 = arith.mulf %23, %25 : vector<8x4xf32>
    %c0_21 = arith.constant 0 : index
    %c0_22 = arith.constant 0 : index
    %27 = vector.load %arg9[%c0_21, %c0_22] : memref<8x32xf32, #tpu.memory_space<vmem>>, vector<8x32xf32>
    %c0_23 = arith.constant 0 : index
    %c0_24 = arith.constant 0 : index
    %c0_25 = arith.constant 0 : index
    %28 = vector.load %arg6[%c0_23, %c0_24, %c0_25] : memref<8x4x32xf32, #tpu.memory_space<vmem>>, vector<1x4x32xf32>
    %29 = vector.shape_cast %28 : vector<1x4x32xf32> to vector<4x32xf32>
    %cst_26 = arith.constant dense<0.000000e+00> : vector<8x32xf32>
    %30 = tpu.matmul %26, %29, %cst_26 {dimension_numbers = #tpu.dot_dimension_numbers<[1], [0], [0], [1], [0, 0, 1, 1], [], []>} : vector<8x4xf32>, vector<4x32xf32>, vector<8x32xf32> -> vector<8x32xf32>
    %31 = arith.addf %27, %30 : vector<8x32xf32>
    %c0_27 = arith.constant 0 : index
    %c0_28 = arith.constant 0 : index
    %32 = vector.load %arg9[%c0_27, %c0_28] : memref<8x32xf32, #tpu.memory_space<vmem>>, vector<8x32xf32>
    tpu.vector_store %arg9[%c0_27, %c0_28], %31 {strides = array<i32>} : memref<8x32xf32, #tpu.memory_space<vmem>>, vector<8x32xf32>,
    %c1 = arith.constant 1 : index
    %c0_29 = arith.constant 0 : index
    %c0_30 = arith.constant 0 : index
    %33 = vector.load %arg3[%c1, %c0_29, %c0_30] : memref<8x32x4xf32, #tpu.memory_space<vmem>>, vector<1x32x4xf32>
    %34 = vector.shape_cast %33 : vector<1x32x4xf32> to vector<32x4xf32>
    %cst_31 = arith.constant dense<0.000000e+00> : vector<8x4xf32>
    %35 = tpu.matmul %1, %34, %cst_31 {dimension_numbers = #tpu.dot_dimension_numbers<[1], [0], [0], [1], [0, 0, 1, 1], [], []>} : vector<8x32xf32>, vector<32x4xf32>, vector<8x4xf32> -> vector<8x4xf32>
    %c1_32 = arith.constant 1 : index
    %c0_33 = arith.constant 0 : index
    %c0_34 = arith.constant 0 : index
    %36 = vector.load %arg4[%c1_32, %c0_33, %c0_34] : memref<8x32x4xf32, #tpu.memory_space<vmem>>, vector<1x32x4xf32>
    %37 = vector.shape_cast %36 : vector<1x32x4xf32> to vector<32x4xf32>
    %cst_35 = arith.constant dense<0.000000e+00> : vector<8x4xf32>
    %38 = tpu.matmul %1, %37, %cst_35 {dimension_numbers = #tpu.dot_dimension_numbers<[1], [0], [0], [1], [0, 0, 1, 1], [], []>} : vector<8x32xf32>, vector<32x4xf32>, vector<8x4xf32> -> vector<8x4xf32>
    %c1_36 = arith.constant 1 : index
    %c0_37 = arith.constant 0 : index
    %c0_38 = arith.constant 0 : index
    %39 = vector.load %arg5[%c1_36, %c0_37, %c0_38] : memref<8x32x4xf32, #tpu.memory_space<vmem>>, vector<1x32x4xf32>
    %40 = vector.shape_cast %39 : vector<1x32x4xf32> to vector<32x4xf32>
    %cst_39 = arith.constant dense<0.000000e+00> : vector<8x4xf32>
    %41 = tpu.matmul %1, %40, %cst_39 {dimension_numbers = #tpu.dot_dimension_numbers<[1], [0], [0], [1], [0, 0, 1, 1], [], []>} : vector<8x32xf32>, vector<32x4xf32>, vector<8x4xf32> -> vector<8x4xf32>
    %cst_40 = arith.constant dense<0.000000e+00> : vector<8x8xf32>
    %42 = tpu.matmul %35, %38, %cst_40 {dimension_numbers = #tpu.dot_dimension_numbers<[1], [1], [0], [0], [0, 0, 1, 0], [], []>} : vector<8x4xf32>, vector<8x4xf32>, vector<8x8xf32> -> vector<8x8xf32>
    %cst_41 = arith.constant dense<0xFF800000> : vector<8xf32>
    %43 = vector.multi_reduction <maximumf>, %42, %cst_41 [1] : vector<8x8xf32> to vector<8xf32>
    %44 = vector.shape_cast %43 : vector<8xf32> to vector<8x1xf32>
    %45 = vector.broadcast %44 : vector<8x1xf32> to vector<8x8xf32>
    %46 = arith.subf %42, %45 : vector<8x8xf32>
    %47 = math.exp %46 : vector<8x8xf32>
    %cst_42 = arith.constant dense<0.000000e+00> : vector<8xf32>
    %48 = vector.multi_reduction <add>, %47, %cst_42 [1] : vector<8x8xf32> to vector<8xf32>
    %49 = vector.shape_cast %48 : vector<8xf32> to vector<8x1xf32>
    %cst_43 = arith.constant dense<0.000000e+00> : vector<8x4xf32>
    %50 = tpu.matmul %47, %41, %cst_43 {dimension_numbers = #tpu.dot_dimension_numbers<[1], [0], [0], [1], [0, 0, 1, 1], [], []>} : vector<8x8xf32>, vector<8x4xf32>, vector<8x4xf32> -> vector<8x4xf32>
    %51 = tpu.reciprocal %49 : vector<8x1xf32> -> vector<8x1xf32>
    %52 = vector.broadcast %51 : vector<8x1xf32> to vector<8x4xf32>
    %53 = arith.mulf %50, %52 : vector<8x4xf32>
    %c0_44 = arith.constant 0 : index
    %c0_45 = arith.constant 0 : index
    %54 = vector.load %arg9[%c0_44, %c0_45] : memref<8x32xf32, #tpu.memory_space<vmem>>, vector<8x32xf32>
    %c1_46 = arith.constant 1 : index
    %c0_47 = arith.constant 0 : index
    %c0_48 = arith.constant 0 : index
    %55 = vector.load %arg6[%c1_46, %c0_47, %c0_48] : memref<8x4x32xf32, #tpu.memory_space<vmem>>, vector<1x4x32xf32>
    %56 = vector.shape_cast %55 : vector<1x4x32xf32> to vector<4x32xf32>
    %cst_49 = arith.constant dense<0.000000e+00> : vector<8x32xf32>
    %57 = tpu.matmul %53, %56, %cst_49 {dimension_numbers = #tpu.dot_dimension_numbers<[1], [0], [0], [1], [0, 0, 1, 1], [], []>} : vector<8x4xf32>, vector<4x32xf32>, vector<8x32xf32> -> vector<8x32xf32>
    %58 = arith.addf %54, %57 : vector<8x32xf32>
    %c0_50 = arith.constant 0 : index
    %c0_51 = arith.constant 0 : index
    %59 = vector.load %arg9[%c0_50, %c0_51] : memref<8x32xf32, #tpu.memory_space<vmem>>, vector<8x32xf32>
    tpu.vector_store %arg9[%c0_50, %c0_51], %58 {strides = array<i32>} : memref<8x32xf32, #tpu.memory_space<vmem>>, vector<8x32xf32>,
    %c2 = arith.constant 2 : index
    %c0_52 = arith.constant 0 : index
    %c0_53 = arith.constant 0 : index
    %60 = vector.load %arg3[%c2, %c0_52, %c0_53] : memref<8x32x4xf32, #tpu.memory_space<vmem>>, vector<1x32x4xf32>
    %61 = vector.shape_cast %60 : vector<1x32x4xf32> to vector<32x4xf32>
    %cst_54 = arith.constant dense<0.000000e+00> : vector<8x4xf32>
    %62 = tpu.matmul %1, %61, %cst_54 {dimension_numbers = #tpu.dot_dimension_numbers<[1], [0], [0], [1], [0, 0, 1, 1], [], []>} : vector<8x32xf32>, vector<32x4xf32>, vector<8x4xf32> -> vector<8x4xf32>
    %c2_55 = arith.constant 2 : index
    %c0_56 = arith.constant 0 : index
    %c0_57 = arith.constant 0 : index
    %63 = vector.load %arg4[%c2_55, %c0_56, %c0_57] : memref<8x32x4xf32, #tpu.memory_space<vmem>>, vector<1x32x4xf32>
    %64 = vector.shape_cast %63 : vector<1x32x4xf32> to vector<32x4xf32>
    %cst_58 = arith.constant dense<0.000000e+00> : vector<8x4xf32>
    %65 = tpu.matmul %1, %64, %cst_58 {dimension_numbers = #tpu.dot_dimension_numbers<[1], [0], [0], [1], [0, 0, 1, 1], [], []>} : vector<8x32xf32>, vector<32x4xf32>, vector<8x4xf32> -> vector<8x4xf32>
    %c2_59 = arith.constant 2 : index
    %c0_60 = arith.constant 0 : index
    %c0_61 = arith.constant 0 : index
    %66 = vector.load %arg5[%c2_59, %c0_60, %c0_61] : memref<8x32x4xf32, #tpu.memory_space<vmem>>, vector<1x32x4xf32>
    %67 = vector.shape_cast %66 : vector<1x32x4xf32> to vector<32x4xf32>
    %cst_62 = arith.constant dense<0.000000e+00> : vector<8x4xf32>
    %68 = tpu.matmul %1, %67, %cst_62 {dimension_numbers = #tpu.dot_dimension_numbers<[1], [0], [0], [1], [0, 0, 1, 1], [], []>} : vector<8x32xf32>, vector<32x4xf32>, vector<8x4xf32> -> vector<8x4xf32>
    %cst_63 = arith.constant dense<0.000000e+00> : vector<8x8xf32>
    %69 = tpu.matmul %62, %65, %cst_63 {dimension_numbers = #tpu.dot_dimension_numbers<[1], [1], [0], [0], [0, 0, 1, 0], [], []>} : vector<8x4xf32>, vector<8x4xf32>, vector<8x8xf32> -> vector<8x8xf32>
    %cst_64 = arith.constant dense<0xFF800000> : vector<8xf32>
    %70 = vector.multi_reduction <maximumf>, %69, %cst_64 [1] : vector<8x8xf32> to vector<8xf32>
    %71 = vector.shape_cast %70 : vector<8xf32> to vector<8x1xf32>
    %72 = vector.broadcast %71 : vector<8x1xf32> to vector<8x8xf32>
    %73 = arith.subf %69, %72 : vector<8x8xf32>
    %74 = math.exp %73 : vector<8x8xf32>
    %cst_65 = arith.constant dense<0.000000e+00> : vector<8xf32>
    %75 = vector.multi_reduction <add>, %74, %cst_65 [1] : vector<8x8xf32> to vector<8xf32>
    %76 = vector.shape_cast %75 : vector<8xf32> to vector<8x1xf32>
    %cst_66 = arith.constant dense<0.000000e+00> : vector<8x4xf32>
    %77 = tpu.matmul %74, %68, %cst_66 {dimension_numbers = #tpu.dot_dimension_numbers<[1], [0], [0], [1], [0, 0, 1, 1], [], []>} : vector<8x8xf32>, vector<8x4xf32>, vector<8x4xf32> -> vector<8x4xf32>
    %78 = tpu.reciprocal %76 : vector<8x1xf32> -> vector<8x1xf32>
    %79 = vector.broadcast %78 : vector<8x1xf32> to vector<8x4xf32>
    %80 = arith.mulf %77, %79 : vector<8x4xf32>
    %c0_67 = arith.constant 0 : index
    %c0_68 = arith.constant 0 : index
    %81 = vector.load %arg9[%c0_67, %c0_68] : memref<8x32xf32, #tpu.memory_space<vmem>>, vector<8x32xf32>
    %c2_69 = arith.constant 2 : index
    %c0_70 = arith.constant 0 : index
    %c0_71 = arith.constant 0 : index
    %82 = vector.load %arg6[%c2_69, %c0_70, %c0_71] : memref<8x4x32xf32, #tpu.memory_space<vmem>>, vector<1x4x32xf32>
    %83 = vector.shape_cast %82 : vector<1x4x32xf32> to vector<4x32xf32>
    %cst_72 = arith.constant dense<0.000000e+00> : vector<8x32xf32>
    %84 = tpu.matmul %80, %83, %cst_72 {dimension_numbers = #tpu.dot_dimension_numbers<[1], [0], [0], [1], [0, 0, 1, 1], [], []>} : vector<8x4xf32>, vector<4x32xf32>, vector<8x32xf32> -> vector<8x32xf32>
    %85 = arith.addf %81, %84 : vector<8x32xf32>
    %c0_73 = arith.constant 0 : index
    %c0_74 = arith.constant 0 : index
    %86 = vector.load %arg9[%c0_73, %c0_74] : memref<8x32xf32, #tpu.memory_space<vmem>>, vector<8x32xf32>
    tpu.vector_store %arg9[%c0_73, %c0_74], %85 {strides = array<i32>} : memref<8x32xf32, #tpu.memory_space<vmem>>, vector<8x32xf32>,
    %c3 = arith.constant 3 : index
    %c0_75 = arith.constant 0 : index
    %c0_76 = arith.constant 0 : index
    %87 = vector.load %arg3[%c3, %c0_75, %c0_76] : memref<8x32x4xf32, #tpu.memory_space<vmem>>, vector<1x32x4xf32>
    %88 = vector.shape_cast %87 : vector<1x32x4xf32> to vector<32x4xf32>
    %cst_77 = arith.constant dense<0.000000e+00> : vector<8x4xf32>
    %89 = tpu.matmul %1, %88, %cst_77 {dimension_numbers = #tpu.dot_dimension_numbers<[1], [0], [0], [1], [0, 0, 1, 1], [], []>} : vector<8x32xf32>, vector<32x4xf32>, vector<8x4xf32> -> vector<8x4xf32>
    %c3_78 = arith.constant 3 : index
    %c0_79 = arith.constant 0 : index
    %c0_80 = arith.constant 0 : index
    %90 = vector.load %arg4[%c3_78, %c0_79, %c0_80] : memref<8x32x4xf32, #tpu.memory_space<vmem>>, vector<1x32x4xf32>
    %91 = vector.shape_cast %90 : vector<1x32x4xf32> to vector<32x4xf32>
    %cst_81 = arith.constant dense<0.000000e+00> : vector<8x4xf32>
    %92 = tpu.matmul %1, %91, %cst_81 {dimension_numbers = #tpu.dot_dimension_numbers<[1], [0], [0], [1], [0, 0, 1, 1], [], []>} : vector<8x32xf32>, vector<32x4xf32>, vector<8x4xf32> -> vector<8x4xf32>
    %c3_82 = arith.constant 3 : index
    %c0_83 = arith.constant 0 : index
    %c0_84 = arith.constant 0 : index
    %93 = vector.load %arg5[%c3_82, %c0_83, %c0_84] : memref<8x32x4xf32, #tpu.memory_space<vmem>>, vector<1x32x4xf32>
    %94 = vector.shape_cast %93 : vector<1x32x4xf32> to vector<32x4xf32>
    %cst_85 = arith.constant dense<0.000000e+00> : vector<8x4xf32>
    %95 = tpu.matmul %1, %94, %cst_85 {dimension_numbers = #tpu.dot_dimension_numbers<[1], [0], [0], [1], [0, 0, 1, 1], [], []>} : vector<8x32xf32>, vector<32x4xf32>, vector<8x4xf32> -> vector<8x4xf32>
    %cst_86 = arith.constant dense<0.000000e+00> : vector<8x8xf32>
    %96 = tpu.matmul %89, %92, %cst_86 {dimension_numbers = #tpu.dot_dimension_numbers<[1], [1], [0], [0], [0, 0, 1, 0], [], []>} : vector<8x4xf32>, vector<8x4xf32>, vector<8x8xf32> -> vector<8x8xf32>
    %cst_87 = arith.constant dense<0xFF800000> : vector<8xf32>
    %97 = vector.multi_reduction <maximumf>, %96, %cst_87 [1] : vector<8x8xf32> to vector<8xf32>
    %98 = vector.shape_cast %97 : vector<8xf32> to vector<8x1xf32>
    %99 = vector.broadcast %98 : vector<8x1xf32> to vector<8x8xf32>
    %100 = arith.subf %96, %99 : vector<8x8xf32>
    %101 = math.exp %100 : vector<8x8xf32>
    %cst_88 = arith.constant dense<0.000000e+00> : vector<8xf32>
    %102 = vector.multi_reduction <add>, %101, %cst_88 [1] : vector<8x8xf32> to vector<8xf32>
    %103 = vector.shape_cast %102 : vector<8xf32> to vector<8x1xf32>
    %cst_89 = arith.constant dense<0.000000e+00> : vector<8x4xf32>
    %104 = tpu.matmul %101, %95, %cst_89 {dimension_numbers = #tpu.dot_dimension_numbers<[1], [0], [0], [1], [0, 0, 1, 1], [], []>} : vector<8x8xf32>, vector<8x4xf32>, vector<8x4xf32> -> vector<8x4xf32>
    %105 = tpu.reciprocal %103 : vector<8x1xf32> -> vector<8x1xf32>
    %106 = vector.broadcast %105 : vector<8x1xf32> to vector<8x4xf32>
    %107 = arith.mulf %104, %106 : vector<8x4xf32>
    %c0_90 = arith.constant 0 : index
    %c0_91 = arith.constant 0 : index
    %108 = vector.load %arg9[%c0_90, %c0_91] : memref<8x32xf32, #tpu.memory_space<vmem>>, vector<8x32xf32>
    %c3_92 = arith.constant 3 : index
    %c0_93 = arith.constant 0 : index
    %c0_94 = arith.constant 0 : index
    %109 = vector.load %arg6[%c3_92, %c0_93, %c0_94] : memref<8x4x32xf32, #tpu.memory_space<vmem>>, vector<1x4x32xf32>
    %110 = vector.shape_cast %109 : vector<1x4x32xf32> to vector<4x32xf32>
    %cst_95 = arith.constant dense<0.000000e+00> : vector<8x32xf32>
    %111 = tpu.matmul %107, %110, %cst_95 {dimension_numbers = #tpu.dot_dimension_numbers<[1], [0], [0], [1], [0, 0, 1, 1], [], []>} : vector<8x4xf32>, vector<4x32xf32>, vector<8x32xf32> -> vector<8x32xf32>
    %112 = arith.addf %108, %111 : vector<8x32xf32>
    %c0_96 = arith.constant 0 : index
    %c0_97 = arith.constant 0 : index
    %113 = vector.load %arg9[%c0_96, %c0_97] : memref<8x32xf32, #tpu.memory_space<vmem>>, vector<8x32xf32>
    tpu.vector_store %arg9[%c0_96, %c0_97], %112 {strides = array<i32>} : memref<8x32xf32, #tpu.memory_space<vmem>>, vector<8x32xf32>,
    %c4 = arith.constant 4 : index
    %c0_98 = arith.constant 0 : index
    %c0_99 = arith.constant 0 : index
    %114 = vector.load %arg3[%c4, %c0_98, %c0_99] : memref<8x32x4xf32, #tpu.memory_space<vmem>>, vector<1x32x4xf32>
    %115 = vector.shape_cast %114 : vector<1x32x4xf32> to vector<32x4xf32>
    %cst_100 = arith.constant dense<0.000000e+00> : vector<8x4xf32>
    %116 = tpu.matmul %1, %115, %cst_100 {dimension_numbers = #tpu.dot_dimension_numbers<[1], [0], [0], [1], [0, 0, 1, 1], [], []>} : vector<8x32xf32>, vector<32x4xf32>, vector<8x4xf32> -> vector<8x4xf32>
    %c4_101 = arith.constant 4 : index
    %c0_102 = arith.constant 0 : index
    %c0_103 = arith.constant 0 : index
    %117 = vector.load %arg4[%c4_101, %c0_102, %c0_103] : memref<8x32x4xf32, #tpu.memory_space<vmem>>, vector<1x32x4xf32>
    %118 = vector.shape_cast %117 : vector<1x32x4xf32> to vector<32x4xf32>
    %cst_104 = arith.constant dense<0.000000e+00> : vector<8x4xf32>
    %119 = tpu.matmul %1, %118, %cst_104 {dimension_numbers = #tpu.dot_dimension_numbers<[1], [0], [0], [1], [0, 0, 1, 1], [], []>} : vector<8x32xf32>, vector<32x4xf32>, vector<8x4xf32> -> vector<8x4xf32>
    %c4_105 = arith.constant 4 : index
    %c0_106 = arith.constant 0 : index
    %c0_107 = arith.constant 0 : index
    %120 = vector.load %arg5[%c4_105, %c0_106, %c0_107] : memref<8x32x4xf32, #tpu.memory_space<vmem>>, vector<1x32x4xf32>
    %121 = vector.shape_cast %120 : vector<1x32x4xf32> to vector<32x4xf32>
    %cst_108 = arith.constant dense<0.000000e+00> : vector<8x4xf32>
    %122 = tpu.matmul %1, %121, %cst_108 {dimension_numbers = #tpu.dot_dimension_numbers<[1], [0], [0], [1], [0, 0, 1, 1], [], []>} : vector<8x32xf32>, vector<32x4xf32>, vector<8x4xf32> -> vector<8x4xf32>
    %cst_109 = arith.constant dense<0.000000e+00> : vector<8x8xf32>
    %123 = tpu.matmul %116, %119, %cst_109 {dimension_numbers = #tpu.dot_dimension_numbers<[1], [1], [0], [0], [0, 0, 1, 0], [], []>} : vector<8x4xf32>, vector<8x4xf32>, vector<8x8xf32> -> vector<8x8xf32>
    %cst_110 = arith.constant dense<0xFF800000> : vector<8xf32>
    %124 = vector.multi_reduction <maximumf>, %123, %cst_110 [1] : vector<8x8xf32> to vector<8xf32>
    %125 = vector.shape_cast %124 : vector<8xf32> to vector<8x1xf32>
    %126 = vector.broadcast %125 : vector<8x1xf32> to vector<8x8xf32>
    %127 = arith.subf %123, %126 : vector<8x8xf32>
    %128 = math.exp %127 : vector<8x8xf32>
    %cst_111 = arith.constant dense<0.000000e+00> : vector<8xf32>
    %129 = vector.multi_reduction <add>, %128, %cst_111 [1] : vector<8x8xf32> to vector<8xf32>
    %130 = vector.shape_cast %129 : vector<8xf32> to vector<8x1xf32>
    %cst_112 = arith.constant dense<0.000000e+00> : vector<8x4xf32>
    %131 = tpu.matmul %128, %122, %cst_112 {dimension_numbers = #tpu.dot_dimension_numbers<[1], [0], [0], [1], [0, 0, 1, 1], [], []>} : vector<8x8xf32>, vector<8x4xf32>, vector<8x4xf32> -> vector<8x4xf32>
    %132 = tpu.reciprocal %130 : vector<8x1xf32> -> vector<8x1xf32>
    %133 = vector.broadcast %132 : vector<8x1xf32> to vector<8x4xf32>
    %134 = arith.mulf %131, %133 : vector<8x4xf32>
    %c0_113 = arith.constant 0 : index
    %c0_114 = arith.constant 0 : index
    %135 = vector.load %arg9[%c0_113, %c0_114] : memref<8x32xf32, #tpu.memory_space<vmem>>, vector<8x32xf32>
    %c4_115 = arith.constant 4 : index
    %c0_116 = arith.constant 0 : index
    %c0_117 = arith.constant 0 : index
    %136 = vector.load %arg6[%c4_115, %c0_116, %c0_117] : memref<8x4x32xf32, #tpu.memory_space<vmem>>, vector<1x4x32xf32>
    %137 = vector.shape_cast %136 : vector<1x4x32xf32> to vector<4x32xf32>
    %cst_118 = arith.constant dense<0.000000e+00> : vector<8x32xf32>
    %138 = tpu.matmul %134, %137, %cst_118 {dimension_numbers = #tpu.dot_dimension_numbers<[1], [0], [0], [1], [0, 0, 1, 1], [], []>} : vector<8x4xf32>, vector<4x32xf32>, vector<8x32xf32> -> vector<8x32xf32>
    %139 = arith.addf %135, %138 : vector<8x32xf32>
    %c0_119 = arith.constant 0 : index
    %c0_120 = arith.constant 0 : index
    %140 = vector.load %arg9[%c0_119, %c0_120] : memref<8x32xf32, #tpu.memory_space<vmem>>, vector<8x32xf32>
    tpu.vector_store %arg9[%c0_119, %c0_120], %139 {strides = array<i32>} : memref<8x32xf32, #tpu.memory_space<vmem>>, vector<8x32xf32>,
    %c5 = arith.constant 5 : index
    %c0_121 = arith.constant 0 : index
    %c0_122 = arith.constant 0 : index
    %141 = vector.load %arg3[%c5, %c0_121, %c0_122] : memref<8x32x4xf32, #tpu.memory_space<vmem>>, vector<1x32x4xf32>
    %142 = vector.shape_cast %141 : vector<1x32x4xf32> to vector<32x4xf32>
    %cst_123 = arith.constant dense<0.000000e+00> : vector<8x4xf32>
    %143 = tpu.matmul %1, %142, %cst_123 {dimension_numbers = #tpu.dot_dimension_numbers<[1], [0], [0], [1], [0, 0, 1, 1], [], []>} : vector<8x32xf32>, vector<32x4xf32>, vector<8x4xf32> -> vector<8x4xf32>
    %c5_124 = arith.constant 5 : index
    %c0_125 = arith.constant 0 : index
    %c0_126 = arith.constant 0 : index
    %144 = vector.load %arg4[%c5_124, %c0_125, %c0_126] : memref<8x32x4xf32, #tpu.memory_space<vmem>>, vector<1x32x4xf32>
    %145 = vector.shape_cast %144 : vector<1x32x4xf32> to vector<32x4xf32>
    %cst_127 = arith.constant dense<0.000000e+00> : vector<8x4xf32>
    %146 = tpu.matmul %1, %145, %cst_127 {dimension_numbers = #tpu.dot_dimension_numbers<[1], [0], [0], [1], [0, 0, 1, 1], [], []>} : vector<8x32xf32>, vector<32x4xf32>, vector<8x4xf32> -> vector<8x4xf32>
    %c5_128 = arith.constant 5 : index
    %c0_129 = arith.constant 0 : index
    %c0_130 = arith.constant 0 : index
    %147 = vector.load %arg5[%c5_128, %c0_129, %c0_130] : memref<8x32x4xf32, #tpu.memory_space<vmem>>, vector<1x32x4xf32>
    %148 = vector.shape_cast %147 : vector<1x32x4xf32> to vector<32x4xf32>
    %cst_131 = arith.constant dense<0.000000e+00> : vector<8x4xf32>
    %149 = tpu.matmul %1, %148, %cst_131 {dimension_numbers = #tpu.dot_dimension_numbers<[1], [0], [0], [1], [0, 0, 1, 1], [], []>} : vector<8x32xf32>, vector<32x4xf32>, vector<8x4xf32> -> vector<8x4xf32>
    %cst_132 = arith.constant dense<0.000000e+00> : vector<8x8xf32>
    %150 = tpu.matmul %143, %146, %cst_132 {dimension_numbers = #tpu.dot_dimension_numbers<[1], [1], [0], [0], [0, 0, 1, 0], [], []>} : vector<8x4xf32>, vector<8x4xf32>, vector<8x8xf32> -> vector<8x8xf32>
    %cst_133 = arith.constant dense<0xFF800000> : vector<8xf32>
    %151 = vector.multi_reduction <maximumf>, %150, %cst_133 [1] : vector<8x8xf32> to vector<8xf32>
    %152 = vector.shape_cast %151 : vector<8xf32> to vector<8x1xf32>
    %153 = vector.broadcast %152 : vector<8x1xf32> to vector<8x8xf32>
    %154 = arith.subf %150, %153 : vector<8x8xf32>
    %155 = math.exp %154 : vector<8x8xf32>
    %cst_134 = arith.constant dense<0.000000e+00> : vector<8xf32>
    %156 = vector.multi_reduction <add>, %155, %cst_134 [1] : vector<8x8xf32> to vector<8xf32>
    %157 = vector.shape_cast %156 : vector<8xf32> to vector<8x1xf32>
    %cst_135 = arith.constant dense<0.000000e+00> : vector<8x4xf32>
    %158 = tpu.matmul %155, %149, %cst_135 {dimension_numbers = #tpu.dot_dimension_numbers<[1], [0], [0], [1], [0, 0, 1, 1], [], []>} : vector<8x8xf32>, vector<8x4xf32>, vector<8x4xf32> -> vector<8x4xf32>
    %159 = tpu.reciprocal %157 : vector<8x1xf32> -> vector<8x1xf32>
    %160 = vector.broadcast %159 : vector<8x1xf32> to vector<8x4xf32>
    %161 = arith.mulf %158, %160 : vector<8x4xf32>
    %c0_136 = arith.constant 0 : index
    %c0_137 = arith.constant 0 : index
    %162 = vector.load %arg9[%c0_136, %c0_137] : memref<8x32xf32, #tpu.memory_space<vmem>>, vector<8x32xf32>
    %c5_138 = arith.constant 5 : index
    %c0_139 = arith.constant 0 : index
    %c0_140 = arith.constant 0 : index
    %163 = vector.load %arg6[%c5_138, %c0_139, %c0_140] : memref<8x4x32xf32, #tpu.memory_space<vmem>>, vector<1x4x32xf32>
    %164 = vector.shape_cast %163 : vector<1x4x32xf32> to vector<4x32xf32>
    %cst_141 = arith.constant dense<0.000000e+00> : vector<8x32xf32>
    %165 = tpu.matmul %161, %164, %cst_141 {dimension_numbers = #tpu.dot_dimension_numbers<[1], [0], [0], [1], [0, 0, 1, 1], [], []>} : vector<8x4xf32>, vector<4x32xf32>, vector<8x32xf32> -> vector<8x32xf32>
    %166 = arith.addf %162, %165 : vector<8x32xf32>
    %c0_142 = arith.constant 0 : index
    %c0_143 = arith.constant 0 : index
    %167 = vector.load %arg9[%c0_142, %c0_143] : memref<8x32xf32, #tpu.memory_space<vmem>>, vector<8x32xf32>
    tpu.vector_store %arg9[%c0_142, %c0_143], %166 {strides = array<i32>} : memref<8x32xf32, #tpu.memory_space<vmem>>, vector<8x32xf32>,
    %c6 = arith.constant 6 : index
    %c0_144 = arith.constant 0 : index
    %c0_145 = arith.constant 0 : index
    %168 = vector.load %arg3[%c6, %c0_144, %c0_145] : memref<8x32x4xf32, #tpu.memory_space<vmem>>, vector<1x32x4xf32>
    %169 = vector.shape_cast %168 : vector<1x32x4xf32> to vector<32x4xf32>
    %cst_146 = arith.constant dense<0.000000e+00> : vector<8x4xf32>
    %170 = tpu.matmul %1, %169, %cst_146 {dimension_numbers = #tpu.dot_dimension_numbers<[1], [0], [0], [1], [0, 0, 1, 1], [], []>} : vector<8x32xf32>, vector<32x4xf32>, vector<8x4xf32> -> vector<8x4xf32>
    %c6_147 = arith.constant 6 : index
    %c0_148 = arith.constant 0 : index
    %c0_149 = arith.constant 0 : index
    %171 = vector.load %arg4[%c6_147, %c0_148, %c0_149] : memref<8x32x4xf32, #tpu.memory_space<vmem>>, vector<1x32x4xf32>
    %172 = vector.shape_cast %171 : vector<1x32x4xf32> to vector<32x4xf32>
    %cst_150 = arith.constant dense<0.000000e+00> : vector<8x4xf32>
    %173 = tpu.matmul %1, %172, %cst_150 {dimension_numbers = #tpu.dot_dimension_numbers<[1], [0], [0], [1], [0, 0, 1, 1], [], []>} : vector<8x32xf32>, vector<32x4xf32>, vector<8x4xf32> -> vector<8x4xf32>
    %c6_151 = arith.constant 6 : index
    %c0_152 = arith.constant 0 : index
    %c0_153 = arith.constant 0 : index
    %174 = vector.load %arg5[%c6_151, %c0_152, %c0_153] : memref<8x32x4xf32, #tpu.memory_space<vmem>>, vector<1x32x4xf32>
    %175 = vector.shape_cast %174 : vector<1x32x4xf32> to vector<32x4xf32>
    %cst_154 = arith.constant dense<0.000000e+00> : vector<8x4xf32>
    %176 = tpu.matmul %1, %175, %cst_154 {dimension_numbers = #tpu.dot_dimension_numbers<[1], [0], [0], [1], [0, 0, 1, 1], [], []>} : vector<8x32xf32>, vector<32x4xf32>, vector<8x4xf32> -> vector<8x4xf32>
    %cst_155 = arith.constant dense<0.000000e+00> : vector<8x8xf32>
    %177 = tpu.matmul %170, %173, %cst_155 {dimension_numbers = #tpu.dot_dimension_numbers<[1], [1], [0], [0], [0, 0, 1, 0], [], []>} : vector<8x4xf32>, vector<8x4xf32>, vector<8x8xf32> -> vector<8x8xf32>
    %cst_156 = arith.constant dense<0xFF800000> : vector<8xf32>
    %178 = vector.multi_reduction <maximumf>, %177, %cst_156 [1] : vector<8x8xf32> to vector<8xf32>
    %179 = vector.shape_cast %178 : vector<8xf32> to vector<8x1xf32>
    %180 = vector.broadcast %179 : vector<8x1xf32> to vector<8x8xf32>
    %181 = arith.subf %177, %180 : vector<8x8xf32>
    %182 = math.exp %181 : vector<8x8xf32>
    %cst_157 = arith.constant dense<0.000000e+00> : vector<8xf32>
    %183 = vector.multi_reduction <add>, %182, %cst_157 [1] : vector<8x8xf32> to vector<8xf32>
    %184 = vector.shape_cast %183 : vector<8xf32> to vector<8x1xf32>
    %cst_158 = arith.constant dense<0.000000e+00> : vector<8x4xf32>
    %185 = tpu.matmul %182, %176, %cst_158 {dimension_numbers = #tpu.dot_dimension_numbers<[1], [0], [0], [1], [0, 0, 1, 1], [], []>} : vector<8x8xf32>, vector<8x4xf32>, vector<8x4xf32> -> vector<8x4xf32>
    %186 = tpu.reciprocal %184 : vector<8x1xf32> -> vector<8x1xf32>
    %187 = vector.broadcast %186 : vector<8x1xf32> to vector<8x4xf32>
    %188 = arith.mulf %185, %187 : vector<8x4xf32>
    %c0_159 = arith.constant 0 : index
    %c0_160 = arith.constant 0 : index
    %189 = vector.load %arg9[%c0_159, %c0_160] : memref<8x32xf32, #tpu.memory_space<vmem>>, vector<8x32xf32>
    %c6_161 = arith.constant 6 : index
    %c0_162 = arith.constant 0 : index
    %c0_163 = arith.constant 0 : index
    %190 = vector.load %arg6[%c6_161, %c0_162, %c0_163] : memref<8x4x32xf32, #tpu.memory_space<vmem>>, vector<1x4x32xf32>
    %191 = vector.shape_cast %190 : vector<1x4x32xf32> to vector<4x32xf32>
    %cst_164 = arith.constant dense<0.000000e+00> : vector<8x32xf32>
    %192 = tpu.matmul %188, %191, %cst_164 {dimension_numbers = #tpu.dot_dimension_numbers<[1], [0], [0], [1], [0, 0, 1, 1], [], []>} : vector<8x4xf32>, vector<4x32xf32>, vector<8x32xf32> -> vector<8x32xf32>
    %193 = arith.addf %189, %192 : vector<8x32xf32>
    %c0_165 = arith.constant 0 : index
    %c0_166 = arith.constant 0 : index
    %194 = vector.load %arg9[%c0_165, %c0_166] : memref<8x32xf32, #tpu.memory_space<vmem>>, vector<8x32xf32>
    tpu.vector_store %arg9[%c0_165, %c0_166], %193 {strides = array<i32>} : memref<8x32xf32, #tpu.memory_space<vmem>>, vector<8x32xf32>,
    %c7 = arith.constant 7 : index
    %c0_167 = arith.constant 0 : index
    %c0_168 = arith.constant 0 : index
    %195 = vector.load %arg3[%c7, %c0_167, %c0_168] : memref<8x32x4xf32, #tpu.memory_space<vmem>>, vector<1x32x4xf32>
    %196 = vector.shape_cast %195 : vector<1x32x4xf32> to vector<32x4xf32>
    %cst_169 = arith.constant dense<0.000000e+00> : vector<8x4xf32>
    %197 = tpu.matmul %1, %196, %cst_169 {dimension_numbers = #tpu.dot_dimension_numbers<[1], [0], [0], [1], [0, 0, 1, 1], [], []>} : vector<8x32xf32>, vector<32x4xf32>, vector<8x4xf32> -> vector<8x4xf32>
    %c7_170 = arith.constant 7 : index
    %c0_171 = arith.constant 0 : index
    %c0_172 = arith.constant 0 : index
    %198 = vector.load %arg4[%c7_170, %c0_171, %c0_172] : memref<8x32x4xf32, #tpu.memory_space<vmem>>, vector<1x32x4xf32>
    %199 = vector.shape_cast %198 : vector<1x32x4xf32> to vector<32x4xf32>
    %cst_173 = arith.constant dense<0.000000e+00> : vector<8x4xf32>
    %200 = tpu.matmul %1, %199, %cst_173 {dimension_numbers = #tpu.dot_dimension_numbers<[1], [0], [0], [1], [0, 0, 1, 1], [], []>} : vector<8x32xf32>, vector<32x4xf32>, vector<8x4xf32> -> vector<8x4xf32>
    %c7_174 = arith.constant 7 : index
    %c0_175 = arith.constant 0 : index
    %c0_176 = arith.constant 0 : index
    %201 = vector.load %arg5[%c7_174, %c0_175, %c0_176] : memref<8x32x4xf32, #tpu.memory_space<vmem>>, vector<1x32x4xf32>
    %202 = vector.shape_cast %201 : vector<1x32x4xf32> to vector<32x4xf32>
    %cst_177 = arith.constant dense<0.000000e+00> : vector<8x4xf32>
    %203 = tpu.matmul %1, %202, %cst_177 {dimension_numbers = #tpu.dot_dimension_numbers<[1], [0], [0], [1], [0, 0, 1, 1], [], []>} : vector<8x32xf32>, vector<32x4xf32>, vector<8x4xf32> -> vector<8x4xf32>
    %cst_178 = arith.constant dense<0.000000e+00> : vector<8x8xf32>
    %204 = tpu.matmul %197, %200, %cst_178 {dimension_numbers = #tpu.dot_dimension_numbers<[1], [1], [0], [0], [0, 0, 1, 0], [], []>} : vector<8x4xf32>, vector<8x4xf32>, vector<8x8xf32> -> vector<8x8xf32>
    %cst_179 = arith.constant dense<0xFF800000> : vector<8xf32>
    %205 = vector.multi_reduction <maximumf>, %204, %cst_179 [1] : vector<8x8xf32> to vector<8xf32>
    %206 = vector.shape_cast %205 : vector<8xf32> to vector<8x1xf32>
    %207 = vector.broadcast %206 : vector<8x1xf32> to vector<8x8xf32>
    %208 = arith.subf %204, %207 : vector<8x8xf32>
    %209 = math.exp %208 : vector<8x8xf32>
    %cst_180 = arith.constant dense<0.000000e+00> : vector<8xf32>
    %210 = vector.multi_reduction <add>, %209, %cst_180 [1] : vector<8x8xf32> to vector<8xf32>
    %211 = vector.shape_cast %210 : vector<8xf32> to vector<8x1xf32>
    %cst_181 = arith.constant dense<0.000000e+00> : vector<8x4xf32>
    %212 = tpu.matmul %209, %203, %cst_181 {dimension_numbers = #tpu.dot_dimension_numbers<[1], [0], [0], [1], [0, 0, 1, 1], [], []>} : vector<8x8xf32>, vector<8x4xf32>, vector<8x4xf32> -> vector<8x4xf32>
    %213 = tpu.reciprocal %211 : vector<8x1xf32> -> vector<8x1xf32>
    %214 = vector.broadcast %213 : vector<8x1xf32> to vector<8x4xf32>
    %215 = arith.mulf %212, %214 : vector<8x4xf32>
    %c0_182 = arith.constant 0 : index
    %c0_183 = arith.constant 0 : index
    %216 = vector.load %arg9[%c0_182, %c0_183] : memref<8x32xf32, #tpu.memory_space<vmem>>, vector<8x32xf32>
    %c7_184 = arith.constant 7 : index
    %c0_185 = arith.constant 0 : index
    %c0_186 = arith.constant 0 : index
    %217 = vector.load %arg6[%c7_184, %c0_185, %c0_186] : memref<8x4x32xf32, #tpu.memory_space<vmem>>, vector<1x4x32xf32>
    %218 = vector.shape_cast %217 : vector<1x4x32xf32> to vector<4x32xf32>
    %cst_187 = arith.constant dense<0.000000e+00> : vector<8x32xf32>
    %219 = tpu.matmul %215, %218, %cst_187 {dimension_numbers = #tpu.dot_dimension_numbers<[1], [0], [0], [1], [0, 0, 1, 1], [], []>} : vector<8x4xf32>, vector<4x32xf32>, vector<8x32xf32> -> vector<8x32xf32>
    %220 = arith.addf %216, %219 : vector<8x32xf32>
    %c0_188 = arith.constant 0 : index
    %c0_189 = arith.constant 0 : index
    %221 = vector.load %arg9[%c0_188, %c0_189] : memref<8x32xf32, #tpu.memory_space<vmem>>, vector<8x32xf32>
    tpu.vector_store %arg9[%c0_188, %c0_189], %220 {strides = array<i32>} : memref<8x32xf32, #tpu.memory_space<vmem>>, vector<8x32xf32>,
    %c0_190 = arith.constant 0 : index
    %c0_191 = arith.constant 0 : index
    %222 = vector.load %arg9[%c0_190, %c0_191] : memref<8x32xf32, #tpu.memory_space<vmem>>, vector<8x32xf32>
    %c0_192 = arith.constant 0 : index
    %c0_193 = arith.constant 0 : index
    %c0_194 = arith.constant 0 : index
    %223 = vector.load %arg8[%c0_192, %c0_193, %c0_194] : memref<1x8x32xf32, #tpu.memory_space<vmem>>, vector<1x8x32xf32>
    %224 = vector.shape_cast %223 : vector<1x8x32xf32> to vector<8x32xf32>
    %225 = vector.shape_cast %222 : vector<8x32xf32> to vector<1x8x32xf32>
    tpu.vector_store %arg8[%c0_192, %c0_193, %c0_194], %225 {strides = array<i32>} : memref<1x8x32xf32, #tpu.memory_space<vmem>>, vector<1x8x32xf32>,
    return
  }
  func.func @transform_0(%arg0: i32, %arg1: i32) -> (i32, i32, i32) {
    %c0_i32 = arith.constant 0 : i32
    %c0_i32_0 = arith.constant 0 : i32
    %c0_i32_1 = arith.constant 0 : i32
    return %arg0, %c0_i32, %c0_i32_0 : i32, i32, i32
  }
  func.func @transform_1(%arg0: i32, %arg1: i32) -> (i32, i32, i32) {
    %c0_i32 = arith.constant 0 : i32
    %c0_i32_0 = arith.constant 0 : i32
    %c0_i32_1 = arith.constant 0 : i32
    %c0_i32_2 = arith.constant 0 : i32
    return %c0_i32, %c0_i32_0, %c0_i32_1 : i32, i32, i32
  }
  func.func @transform_2(%arg0: i32, %arg1: i32) -> (i32, i32, i32) {
    %c0_i32 = arith.constant 0 : i32
    %c0_i32_0 = arith.constant 0 : i32
    %c0_i32_1 = arith.constant 0 : i32
    %c0_i32_2 = arith.constant 0 : i32
    return %c0_i32, %c0_i32_0, %c0_i32_1 : i32, i32, i32
  }
  func.func @transform_3(%arg0: i32, %arg1: i32) -> (i32, i32, i32) {
    %c0_i32 = arith.constant 0 : i32
    %c0_i32_0 = arith.constant 0 : i32
    %c0_i32_1 = arith.constant 0 : i32
    %c0_i32_2 = arith.constant 0 : i32
    return %c0_i32, %c0_i32_0, %c0_i32_1 : i32, i32, i32
  }
  func.func @transform_4(%arg0: i32, %arg1: i32) -> (i32, i32, i32) {
    %c0_i32 = arith.constant 0 : i32
    %c0_i32_0 = arith.constant 0 : i32
    %c0_i32_1 = arith.constant 0 : i32
    %c0_i32_2 = arith.constant 0 : i32
    return %c0_i32, %c0_i32_0, %c0_i32_1 : i32, i32, i32
  }
  func.func @transform_5(%arg0: i32, %arg1: i32) -> (i32, i32) {
    %c0_i32 = arith.constant 0 : i32
    %c0_i32_0 = arith.constant 0 : i32
    %c0_i32_1 = arith.constant 0 : i32
    return %c0_i32, %c0_i32_0 : i32, i32
  }
  func.func @transform_6(%arg0: i32, %arg1: i32) -> (i32, i32, i32) {
    %c0_i32 = arith.constant 0 : i32
    %c0_i32_0 = arith.constant 0 : i32
    return %arg0, %arg1, %c0_i32 : i32, i32, i32
  }
}

</mosaic_0001>

<llo_original>
// kernel: tpu_custom_call.1
$region0: #{tpu_custom_call.1}
  #allocation0 [shape = 'u32[]', space=smem, size = 0x4, offset = 0x4, fixed_abs, tag = 'smem constant byte address 0x4 - core index']
  #allocation1 [shape = 'u32[72,128]{1,0:T(1,128)}', space=vmem, size = 0x9000, scoped, tag = 'internal scratch']
  #allocation2 [shape = 'f32[8,32]{1,0:T(8,128)}', space=vmem, size = 0x1000, scoped, tag = 'scratch operand']
  %s0 = inlined_call_operand.vmem [shape: f32[2,8,32], index: 0, kind: input, shape index: {}]
  %s1 = inlined_call_operand.vmem [shape: f32[8,32,4], index: 1, kind: input, shape index: {}]
  %s2 = inlined_call_operand.vmem [shape: f32[8,32,4], index: 2, kind: input, shape index: {}]
  %s3 = inlined_call_operand.vmem [shape: f32[8,32,4], index: 3, kind: input, shape index: {}]
  %s4 = inlined_call_operand.vmem [shape: f32[8,4,32], index: 4, kind: input, shape index: {}]
  %s5 = inlined_call_operand.vmem [shape: f32[1,32], index: 5, kind: input, shape index: {}]
  %s6 = inlined_call_operand.hbm [shape: f32[2,8,32], index: 6, kind: output, shape index: {}]
  %s7 = sld [smem:[#allocation0]]
  $region57: #{tpu_custom_call.1} parent=0
    _
  %s9 = ssub.s32 1, %s7
  %s10 = scalar_select 0, %s9, %s7
  $region1: #{tpu_custom_call.1} parent=0
    #allocation3 [shape = 'u8[8192]{0}', space=vmem, size = 0x2000, scoped, tag = 'output window, operand 0']
    #allocation4 [shape = 's32[2]{0}', space=sflag, size = 0x8, scoped, tag = 'scoped memory for tpu_custom_call.1']
    %11 = vsyncpa [#allocation4], 0
    %s12 = scalar_lea.sflag [#allocation4], 1
    %13 = vsyncpa %s12, 0
    loop: start=0, step=1, limit=4
    $region2: #{tpu_custom_call.1} parent=1 // loop_pre_header
      _
    $region3: #{tpu_custom_call.1} parent=1 // loop_header
      %s15 = sphi 0, %s19
      %p16 = scmp.ge.s32.totalorder %s15, 4
      %s22 = sphi 0, %s34
      %s23 = sphi 0, %s30
      %s24 = sphi 0, %s22
      %s25 = sphi 0, %s23
      %s26 = sphi 0, %s24
      %s27 = sphi 0, %s25
      %s37 = sphi 0, %s39
      %s40 = sphi 0, %s37
      %s41 = sphi 0, %s40
      %s57 = sphi 0, %s41
      %s61 = sphi 0, %s61
      %s63 = sphi 0, %s61
      %s64 = sphi 0, %s63
      %s78 = sphi 0, %s64
      %s82 = sphi 0, %s82
      %s84 = sphi 0, %s82
      %s85 = sphi 0, %s84
      %s99 = sphi 0, %s85
      %s103 = sphi 0, %s103
      %s105 = sphi 0, %s103
      %s106 = sphi 0, %s105
      %s120 = sphi 0, %s106
      %s124 = sphi 0, %s124
      %s126 = sphi 0, %s124
      %s127 = sphi 0, %s126
      %s141 = sphi 0, %s127
      %s145 = sphi 0, %s145
      %s147 = sphi 0, %s145
      %s148 = sphi 0, %s147
      %s162 = sphi 0, %s148
      %s170 = sphi 0, %s172
      %s173 = sphi 0, %s170
      %s174 = sphi 0, %s173
      %s190 = sphi 0, %s174
    $region4: #{tpu_custom_call.1} parent=1 // loop_header_branch
      %18 = sbr.rel (%p16) target = $region8
    $region5: #{tpu_custom_call.1} parent=1 // loop_body
      %s20 = ssub.s32 %s15, 1
      %s21 = ssub.s32 %s15, 2
      %s28 = sadd.s32 1, %s23
      %p29 = scmp.ge.s32.totalorder %s28, 1
      %s30 = scalar_select %p29, 0, %s28
      %s31 = sadd.s32 1, %s22
      %s32 = scalar_select %p29, %s31, %s22
      %p33 = scmp.ge.s32.totalorder %s32, 2
      %s34 = scalar_select %p33, 0, %s32
      %s35 = ssub.s32 %s22, %s34
      %p36 = scmp.eq.s32.totalorder %s35, 0
      %s38 = sadd.s32 %s37, 1
      %s39 = scalar_select %p36, %s37, %s38
      %p42 = pneg %p36
      %p43 = scmp.eq.s32.totalorder %s15, 1
      %p44 = por %p42, %p43
      %p45 = scmp.ne.s32.totalorder %s37, %s40
      %p46 = scmp.eq.s32.totalorder %s15, 0
      %p47 = por %p45, %p46
      %p48 = scmp.ne.s32.totalorder %s37, %s40
      %p49 = scmp.eq.s32.totalorder %s20, 1
      %p50 = por %p48, %p49
      %p51 = scmp.ne.s32.totalorder %s40, %s41
      %p52 = scmp.eq.s32.totalorder %s20, 0
      %p53 = por %p51, %p52
      %p54 = scmp.ne.s32.totalorder %s40, %s41
      %p55 = scmp.eq.s32.totalorder %s21, 1
      %p56 = por %p54, %p55
      %p58 = scmp.ne.s32.totalorder %s41, %s57
      %p59 = scmp.eq.s32.totalorder %s21, 0
      %p60 = por %p58, %p59
      %s62 = sadd.s32 %s61, 1
      %p65 = scmp.eq.s32.totalorder %s15, 1
      %p66 = scmp.ne.s32.totalorder %s61, %s63
      %p67 = scmp.eq.s32.totalorder %s15, 0
      %p68 = por %p66, %p67
      %p69 = scmp.ne.s32.totalorder %s61, %s63
      %p70 = scmp.eq.s32.totalorder %s20, 1
      %p71 = por %p69, %p70
      %p72 = scmp.ne.s32.totalorder %s63, %s64
      %p73 = scmp.eq.s32.totalorder %s20, 0
      %p74 = por %p72, %p73
      %p75 = scmp.ne.s32.totalorder %s63, %s64
      %p76 = scmp.eq.s32.totalorder %s21, 1
      %p77 = por %p75, %p76
      %p79 = scmp.ne.s32.totalorder %s64, %s78
      %p80 = scmp.eq.s32.totalorder %s21, 0
      %p81 = por %p79, %p80
      %s83 = sadd.s32 %s82, 1
      %p86 = scmp.eq.s32.totalorder %s15, 1
      %p87 = scmp.ne.s32.totalorder %s82, %s84
      %p88 = scmp.eq.s32.totalorder %s15, 0
      %p89 = por %p87, %p88
      %p90 = scmp.ne.s32.totalorder %s82, %s84
      %p91 = scmp.eq.s32.totalorder %s20, 1
      %p92 = por %p90, %p91
      %p93 = scmp.ne.s32.totalorder %s84, %s85
      %p94 = scmp.eq.s32.totalorder %s20, 0
      %p95 = por %p93, %p94
      %p96 = scmp.ne.s32.totalorder %s84, %s85
      %p97 = scmp.eq.s32.totalorder %s21, 1
      %p98 = por %p96, %p97
      %p100 = scmp.ne.s32.totalorder %s85, %s99
      %p101 = scmp.eq.s32.totalorder %s21, 0
      %p102 = por %p100, %p101
      %s104 = sadd.s32 %s103, 1
      %p107 = scmp.eq.s32.totalorder %s15, 1
      %p108 = scmp.ne.s32.totalorder %s103, %s105
      %p109 = scmp.eq.s32.totalorder %s15, 0
      %p110 = por %p108, %p109
      %p111 = scmp.ne.s32.totalorder %s103, %s105
      %p112 = scmp.eq.s32.totalorder %s20, 1
      %p113 = por %p111, %p112
      %p114 = scmp.ne.s32.totalorder %s105, %s106
      %p115 = scmp.eq.s32.totalorder %s20, 0
      %p116 = por %p114, %p115
      %p117 = scmp.ne.s32.totalorder %s105, %s106
      %p118 = scmp.eq.s32.totalorder %s21, 1
      %p119 = por %p117, %p118
      %p121 = scmp.ne.s32.totalorder %s106, %s120
      %p122 = scmp.eq.s32.totalorder %s21, 0
      %p123 = por %p121, %p122
      %s125 = sadd.s32 %s124, 1
      %p128 = scmp.eq.s32.totalorder %s15, 1
      %p129 = scmp.ne.s32.totalorder %s124, %s126
      %p130 = scmp.eq.s32.totalorder %s15, 0
      %p131 = por %p129, %p130
      %p132 = scmp.ne.s32.totalorder %s124, %s126
      %p133 = scmp.eq.s32.totalorder %s20, 1
      %p134 = por %p132, %p133
      %p135 = scmp.ne.s32.totalorder %s126, %s127
      %p136 = scmp.eq.s32.totalorder %s20, 0
      %p137 = por %p135, %p136
      %p138 = scmp.ne.s32.totalorder %s126, %s127
      %p139 = scmp.eq.s32.totalorder %s21, 1
      %p140 = por %p138, %p139
      %p142 = scmp.ne.s32.totalorder %s127, %s141
      %p143 = scmp.eq.s32.totalorder %s21, 0
      %p144 = por %p142, %p143
      %s146 = sadd.s32 %s145, 1
      %p149 = scmp.eq.s32.totalorder %s15, 1
      %p150 = scmp.ne.s32.totalorder %s145, %s147
      %p151 = scmp.eq.s32.totalorder %s15, 0
      %p152 = por %p150, %p151
      %p153 = scmp.ne.s32.totalorder %s145, %s147
      %p154 = scmp.eq.s32.totalorder %s20, 1
      %p155 = por %p153, %p154
      %p156 = scmp.ne.s32.totalorder %s147, %s148
      %p157 = scmp.eq.s32.totalorder %s20, 0
      %p158 = por %p156, %p157
      %p159 = scmp.ne.s32.totalorder %s147, %s148
      %p160 = scmp.eq.s32.totalorder %s21, 1
      %p161 = por %p159, %p160
      %p163 = scmp.ne.s32.totalorder %s148, %s162
      %p164 = scmp.eq.s32.totalorder %s21, 0
      %p165 = por %p163, %p164
      %s166 = ssub.s32 %s22, %s34
      %s167 = ssub.s32 %s23, %s30
      %s168 = sor.u32 %s166, %s167
      %p169 = scmp.eq.s32.totalorder %s168, 0
      %s171 = sadd.s32 %s170, 1
      %s172 = scalar_select %p169, %s170, %s171
      %p175 = pneg %p169
      %p176 = scmp.eq.s32.totalorder %s15, 1
      %p177 = por %p175, %p176
      %p178 = scmp.ne.s32.totalorder %s170, %s173
      %p179 = scmp.eq.s32.totalorder %s15, 0
      %p180 = por %p178, %p179
      %p181 = scmp.ne.s32.totalorder %s170, %s173
      %p182 = scmp.eq.s32.totalorder %s20, 1
      %p183 = por %p181, %p182
      %p184 = scmp.ne.s32.totalorder %s173, %s174
      %p185 = scmp.eq.s32.totalorder %s20, 0
      %p186 = por %p184, %p185
      %p187 = scmp.ne.s32.totalorder %s173, %s174
      %p188 = scmp.eq.s32.totalorder %s21, 1
      %p189 = por %p187, %p188
      %p191 = scmp.ne.s32.totalorder %s174, %s190
      %p192 = scmp.eq.s32.totalorder %s21, 0
      %p193 = por %p191, %p192
      %p194 = scmp.le.s32.totalorder 1, %s15
      %p195 = scmp.lt.s32.totalorder %s15, 3
      %p196 = pnand %p194, %p195
      %p197 = pneg %p196
      // Predicated region
      $region9: #{tpu_custom_call.1} parent=5 // pred_check
        _
      $region10: #{tpu_custom_call.1} parent=5 // pred_check_branch
        %199 = sbr.rel (%p196) target = $region12
      $region11: #{tpu_custom_call.1} parent=5 // pred_region
        %s200 = ssub.s32 %s15, 1
        // Predicated region
        $region13: #{tpu_custom_call.1} parent=11 // pred_check
          %p201 = pneg %p74
        $region14: #{tpu_custom_call.1} parent=11 // pred_check_branch
          %203 = sbr.rel (%p201) target = $region16
        $region15: #{tpu_custom_call.1} parent=11 // pred_region
          _
        $region16: #{tpu_custom_call.1} parent=11 // pred_fallthru
          _
        // Predicated region
        $region17: #{tpu_custom_call.1} parent=11 // pred_check
          %p204 = pneg %p95
        $region18: #{tpu_custom_call.1} parent=11 // pred_check_branch
          %206 = sbr.rel (%p204) target = $region20
        $region19: #{tpu_custom_call.1} parent=11 // pred_region
          _
        $region20: #{tpu_custom_call.1} parent=11 // pred_fallthru
          _
        // Predicated region
        $region21: #{tpu_custom_call.1} parent=11 // pred_check
          %p207 = pneg %p116
        $region22: #{tpu_custom_call.1} parent=11 // pred_check_branch
          %209 = sbr.rel (%p207) target = $region24
        $region23: #{tpu_custom_call.1} parent=11 // pred_region
          _
        $region24: #{tpu_custom_call.1} parent=11 // pred_fallthru
          _
        // Predicated region
        $region25: #{tpu_custom_call.1} parent=11 // pred_check
          %p210 = pneg %p137
        $region26: #{tpu_custom_call.1} parent=11 // pred_check_branch
          %212 = sbr.rel (%p210) target = $region28
        $region27: #{tpu_custom_call.1} parent=11 // pred_region
          _
        $region28: #{tpu_custom_call.1} parent=11 // pred_fallthru
          _
        // Predicated region
        $region29: #{tpu_custom_call.1} parent=11 // pred_check
          %p213 = pneg %p158
        $region30: #{tpu_custom_call.1} parent=11 // pred_check_branch
          %215 = sbr.rel (%p213) target = $region32
        $region31: #{tpu_custom_call.1} parent=11 // pred_region
          _
        $region32: #{tpu_custom_call.1} parent=11 // pred_fallthru
          _
      $region12: #{tpu_custom_call.1} parent=5 // pred_fallthru
        _
      %p216 = scmp.lt.s32.totalorder %s15, 2
      // Predicated region
      $region33: #{tpu_custom_call.1} parent=5 // pred_check
        %p217 = pneg %p216
      $region34: #{tpu_custom_call.1} parent=5 // pred_check_branch
        %219 = sbr.rel (%p217) target = $region36
      $region35: #{tpu_custom_call.1} parent=5 // pred_region
        // Predicated region
        $region37: #{tpu_custom_call.1} parent=35 // pred_check
          %p220 = pneg %p47
        $region38: #{tpu_custom_call.1} parent=35 // pred_check_branch
          %222 = sbr.rel (%p220) target = $region40
        $region39: #{tpu_custom_call.1} parent=35 // pred_region
          %p223 = scmp.lt.s32.totalorder %s22, 1
          %s224 = scalar_select %p223, %s22, 1
          %s225 = smul.addr %s224, 8
          %s226 = scalar_lea.vmem %s0, %s225
        $region40: #{tpu_custom_call.1} parent=35 // pred_fallthru
          _
      $region36: #{tpu_custom_call.1} parent=5 // pred_fallthru
        _
      %p227 = scmp.le.s32.totalorder 1, %s15
      %p228 = scmp.lt.s32.totalorder %s15, 3
      %p229 = pnand %p227, %p228
      %p230 = pneg %p229
      // Predicated region
      $region41: #{tpu_custom_call.1} parent=5 // pred_check
        _
      $region42: #{tpu_custom_call.1} parent=5 // pred_check_branch
        %232 = sbr.rel (%p229) target = $region44
      $region43: #{tpu_custom_call.1} parent=5 // pred_region
        %s233 = ssub.s32 %s15, 1
        %p234 = scmp.lt.s32.totalorder %s24, 1
        %s235 = scalar_select %p234, %s24, 1
        %s236 = smul.addr %s235, 8
        %s237 = scalar_lea.vmem %s0, %s236
        %p238 = pneg %p53
        %p239 = pneg %p50
        %p240 = pneg %p74
        %p241 = pneg %p71
        %p242 = pneg %p95
        %p243 = pneg %p92
        %p244 = pneg %p116
        %p245 = pneg %p113
        %p246 = pneg %p137
        %p247 = pneg %p134
        %p248 = pneg %p158
        %p249 = pneg %p155
        %p250 = pneg %p186
        %p251 = pneg %p183
        %s252 = sand.u32 %s173, 1
        %s253 = scalar_lea.sflag [#allocation4], %s252
        %s254 = sand.u32 %s173, 1
        %s255 = smul.addr %s254, 8
        %s256 = scalar_lea.vmem [#allocation3], %s255
        %p257 = scmp.lt.s32.totalorder %s24, 1
        %s258 = scalar_select %p257, %s24, 1
        %s259 = smul.addr %s258, 8
        %s260 = scalar_lea.vmem %s0, %s259
        %v261 = vld [vmem:[%s260] sm:$0xff]
        %v262 = vld [vmem:[%s5] sm:$0x1]
        %v264 = vperm.slane %v262, 0
        %vm266 = vcmask 261120
        %267 = vst.msk [vmem:[#allocation2] sm:$0xff] %vm266, %v264
        %v268 = vld [vmem:[%s1] sm:$0xff]
        %v269 = vld [vmem:[%s1 + $0x8] sm:$0xff]
        %v270 = vld [vmem:[%s1 + $0x10] sm:$0xff]
        %v271 = vld [vmem:[%s1 + $0x18] sm:$0xff]
        %v273 = vsel %vm266, %v261, 0
        %275 = vmatpush.msra.mxu0 0.0
        %276 = vmatpush.msra.mxu0 0.0
        %277 = vmatpush.msra.mxu0 0.0
        %278 = vmatpush.msra.mxu0 0.0
        %279 = vmatpush.msra.mxu0 0.0
        %280 = vmatpush.msra.mxu0 0.0
        %281 = vmatpush.msra.mxu0 0.0
        %282 = vmatpush.msra.mxu0 0.0
        %283 = vmatpush.msra.mxu0 0.0
        %284 = vmatpush.msra.mxu0 0.0
        %285 = vmatpush.msra.mxu0 0.0
        %286 = vmatpush.msra.mxu0 0.0
        %287 = vmatpush.msra.mxu0 %v271
        %288 = vmatpush.msra.mxu0 %v270
        %289 = vmatpush.msra.mxu0 %v269
        %290 = vmatpush.msra.mxu0 %v268
        %291 = vmatmul.f32.gmra.mxu0 %v273
        %v292 = vpop.f32.mrf.mxu0
        %v293 = vadd.f32 0.0, %v292
        %294 = vdwg.mxu0
        %v295 = vld [vmem:[%s2] sm:$0xff]
        %v296 = vld [vmem:[%s2 + $0x8] sm:$0xff]
        %v297 = vld [vmem:[%s2 + $0x10] sm:$0xff]
        %v298 = vld [vmem:[%s2 + $0x18] sm:$0xff]
        %299 = vmatpush.msra.mxu0 0.0
        %300 = vmatpush.msra.mxu0 0.0
        %301 = vmatpush.msra.mxu0 0.0
        %302 = vmatpush.msra.mxu0 0.0
        %303 = vmatpush.msra.mxu0 0.0
        %304 = vmatpush.msra.mxu0 0.0
        %305 = vmatpush.msra.mxu0 0.0
        %306 = vmatpush.msra.mxu0 0.0
        %307 = vmatpush.msra.mxu0 0.0
        %308 = vmatpush.msra.mxu0 0.0
        %309 = vmatpush.msra.mxu0 0.0
        %310 = vmatpush.msra.mxu0 0.0
        %311 = vmatpush.msra.mxu0 %v298
        %312 = vmatpush.msra.mxu0 %v297
        %313 = vmatpush.msra.mxu0 %v296
        %314 = vmatpush.msra.mxu0 %v295
        %315 = vmatmul.f32.gmra.mxu0 %v273
        %v316 = vpop.f32.mrf.mxu0
        %v317 = vadd.f32 0.0, %v316
        %318 = vdwg.mxu0
        %v319 = vld [vmem:[%s3] sm:$0xff]
        %v320 = vld [vmem:[%s3 + $0x8] sm:$0xff]
        %v321 = vld [vmem:[%s3 + $0x10] sm:$0xff]
        %v322 = vld [vmem:[%s3 + $0x18] sm:$0xff]
        %323 = vmatpush.msra.mxu0 0.0
        %324 = vmatpush.msra.mxu0 0.0
        %325 = vmatpush.msra.mxu0 0.0
        %326 = vmatpush.msra.mxu0 0.0
        %327 = vmatpush.msra.mxu0 0.0
        %328 = vmatpush.msra.mxu0 0.0
        %329 = vmatpush.msra.mxu0 0.0
        %330 = vmatpush.msra.mxu0 0.0
        %331 = vmatpush.msra.mxu0 0.0
        %332 = vmatpush.msra.mxu0 0.0
        %333 = vmatpush.msra.mxu0 0.0
        %334 = vmatpush.msra.mxu0 0.0
        %335 = vmatpush.msra.mxu0 %v322
        %336 = vmatpush.msra.mxu0 %v321
        %337 = vmatpush.msra.mxu0 %v320
        %338 = vmatpush.msra.mxu0 %v319
        %339 = vmatmul.f32.gmra.mxu0 %v273
        %v340 = vpop.f32.mrf.mxu0
        %v341 = vadd.f32 0.0, %v340
        %342 = vdwg.mxu0
        %vm343 = vcmask 31744
        %v345 = vsel %vm343, %v293, 0
        %v348 = vsel %vm343, %v317, 0
        %350 = vmatpush.xpose.msra.mxu0 0.0
        %351 = vmatpush.xpose.msra.mxu0 0.0
        %352 = vmatpush.xpose.msra.mxu0 0.0
        %353 = vmatpush.xpose.msra.mxu0 0.0
        %354 = vmatpush.xpose.msra.mxu0 0.0
        %355 = vmatpush.xpose.msra.mxu0 0.0
        %356 = vmatpush.xpose.msra.mxu0 0.0
        %357 = vmatpush.xpose.msra.mxu0 0.0
        %358 = vmatpush.xpose.msra.mxu0 0.0
        %359 = vmatpush.xpose.msra.mxu0 0.0
        %360 = vmatpush.xpose.msra.mxu0 0.0
        %361 = vmatpush.xpose.msra.mxu0 0.0
        %362 = vmatpush.xpose.msra.mxu0 0.0
        %363 = vmatpush.xpose.msra.mxu0 0.0
        %364 = vmatpush.xpose.msra.mxu0 0.0
        %365 = vmatpush.xpose.msra.mxu0 %v348
        %366 = vmatmul.f32.gmra.mxu0 %v345
        %v367 = vpop.f32.mrf.mxu0
        %v368 = vadd.f32 0.0, %v367
        %369 = vdwg.mxu0
        %vm370 = vcmask 64512
        %v371 = vsel %vm370, %v368, -inf
        %372 = vmax.xlane.f32.xlu0 %v371
        %v373 = vpop.xlane.xlu0 %372
        %v374 = vsub.f32 %v368, %v373
        %v375 = vmul.f32 %v374, 1.442695
        %v376 = vpow.pop %v375
        %v377 = vsel %vm370, %v376, 0.0
        %378 = vadd.xlane.f32.xlu0 %v377
        %v379 = vpop.xlane.xlu0 %378
        %v381 = vsel %vm370, %v376, 0
        %383 = vmatpush.msra.mxu0 0.0
        %384 = vmatpush.msra.mxu0 0.0
        %385 = vmatpush.msra.mxu0 0.0
        %386 = vmatpush.msra.mxu0 0.0
        %387 = vmatpush.msra.mxu0 0.0
        %388 = vmatpush.msra.mxu0 0.0
        %389 = vmatpush.msra.mxu0 0.0
        %390 = vmatpush.msra.mxu0 0.0
        %391 = vmatpush.msra.mxu0 0.0
        %392 = vmatpush.msra.mxu0 0.0
        %393 = vmatpush.msra.mxu0 0.0
        %394 = vmatpush.msra.mxu0 0.0
        %395 = vmatpush.msra.mxu0 0.0
        %396 = vmatpush.msra.mxu0 0.0
        %397 = vmatpush.msra.mxu0 0.0
        %398 = vmatpush.msra.mxu0 %v341
        %399 = vmatmul.f32.gmra.mxu0 %v381
        %v400 = vpop.f32.mrf.mxu0
        %v401 = vadd.f32 0.0, %v400
        %402 = vdwg.mxu0
        %v403 = vrcp.pop %v379
        %v404 = vmul.f32 %v379, %v403
        %v405 = vsub.f32 1.0, %v404
        %v406 = vmul.f32 %v403, %v405
        %v407 = vadd.f32 %v403, %v406
        %vm408 = vweird.f32 %v379
        %vm409 = vweird.f32 %v403
        %vm410 = vmor %vm408, %vm409
        %v411 = vsel %vm410, %v403, %v407
        %v412 = vand.u32 2147483647, %v379
        %vm413 = vcmp.eq.f32.partialorder %v412, 8.507059e+37
        %v414 = vand.u32 %v379, 2147483648
        %v415 = vor.u32 1.1754944e-38, %v414
        %v416 = vsel %vm413, %v415, %v411
        %v417 = vmul.f32 %v401, %v416
        %v418 = vld [vmem:[#allocation2] sm:$0xff]
        %v419 = vld [vmem:[%s4] sm:$0xf]
        %v421 = vsel %vm343, %v417, 0
        %vm423 = vcmask 1043456
        %v425 = vsel %vm423, %v419, 0
        %427 = vmatpush.msra.mxu0 0.0
        %428 = vmatpush.msra.mxu0 0.0
        %429 = vmatpush.msra.mxu0 0.0
        %430 = vmatpush.msra.mxu0 0.0
        %431 = vmatpush.msra.mxu0 0.0
        %432 = vmatpush.msra.mxu0 0.0
        %433 = vmatpush.msra.mxu0 0.0
        %434 = vmatpush.msra.mxu0 0.0
        %435 = vmatpush.msra.mxu0 0.0
        %436 = vmatpush.msra.mxu0 0.0
        %437 = vmatpush.msra.mxu0 0.0
        %438 = vmatpush.msra.mxu0 0.0
        %439 = vmatpush.msra.mxu0 0.0
        %440 = vmatpush.msra.mxu0 0.0
        %441 = vmatpush.msra.mxu0 0.0
        %442 = vmatpush.msra.mxu0 %v425
        %443 = vmatmul.f32.gmra.mxu0 %v421
        %v444 = vpop.f32.mrf.mxu0
        %v445 = vadd.f32 0.0, %v444
        %446 = vdwg.mxu0
        %v447 = vadd.f32 %v418, %v445
        %448 = vst.msk [vmem:[#allocation2] sm:$0xff] %vm266, %v447
        %s449 = scalar_lea.vmem %s1, 32
        %v450 = vld [vmem:[%s449] sm:$0xff]
        %v451 = vld [vmem:[%s449 + $0x8] sm:$0xff]
        %v452 = vld [vmem:[%s449 + $0x10] sm:$0xff]
        %v453 = vld [vmem:[%s449 + $0x18] sm:$0xff]
        %454 = vmatpush.msra.mxu0 0.0
        %455 = vmatpush.msra.mxu0 0.0
        %456 = vmatpush.msra.mxu0 0.0
        %457 = vmatpush.msra.mxu0 0.0
        %458 = vmatpush.msra.mxu0 0.0
        %459 = vmatpush.msra.mxu0 0.0
        %460 = vmatpush.msra.mxu0 0.0
        %461 = vmatpush.msra.mxu0 0.0
        %462 = vmatpush.msra.mxu0 0.0
        %463 = vmatpush.msra.mxu0 0.0
        %464 = vmatpush.msra.mxu0 0.0
        %465 = vmatpush.msra.mxu0 0.0
        %466 = vmatpush.msra.mxu0 %v453
        %467 = vmatpush.msra.mxu0 %v452
        %468 = vmatpush.msra.mxu0 %v451
        %469 = vmatpush.msra.mxu0 %v450
        %470 = vmatmul.f32.gmra.mxu0 %v273
        %v471 = vpop.f32.mrf.mxu0
        %v472 = vadd.f32 0.0, %v471
        %473 = vdwg.mxu0
        %s474 = scalar_lea.vmem %s2, 32
        %v475 = vld [vmem:[%s474] sm:$0xff]
        %v476 = vld [vmem:[%s474 + $0x8] sm:$0xff]
        %v477 = vld [vmem:[%s474 + $0x10] sm:$0xff]
        %v478 = vld [vmem:[%s474 + $0x18] sm:$0xff]
        %479 = vmatpush.msra.mxu0 0.0
        %480 = vmatpush.msra.mxu0 0.0
        %481 = vmatpush.msra.mxu0 0.0
        %482 = vmatpush.msra.mxu0 0.0
        %483 = vmatpush.msra.mxu0 0.0
        %484 = vmatpush.msra.mxu0 0.0
        %485 = vmatpush.msra.mxu0 0.0
        %486 = vmatpush.msra.mxu0 0.0
        %487 = vmatpush.msra.mxu0 0.0
        %488 = vmatpush.msra.mxu0 0.0
        %489 = vmatpush.msra.mxu0 0.0
        %490 = vmatpush.msra.mxu0 0.0
        %491 = vmatpush.msra.mxu0 %v478
        %492 = vmatpush.msra.mxu0 %v477
        %493 = vmatpush.msra.mxu0 %v476
        %494 = vmatpush.msra.mxu0 %v475
        %495 = vmatmul.f32.gmra.mxu0 %v273
        %v496 = vpop.f32.mrf.mxu0
        %v497 = vadd.f32 0.0, %v496
        %498 = vdwg.mxu0
        %s499 = scalar_lea.vmem %s3, 32
        %v500 = vld [vmem:[%s499] sm:$0xff]
        %v501 = vld [vmem:[%s499 + $0x8] sm:$0xff]
        %v502 = vld [vmem:[%s499 + $0x10] sm:$0xff]
        %v503 = vld [vmem:[%s499 + $0x18] sm:$0xff]
        %504 = vmatpush.msra.mxu0 0.0
        %505 = vmatpush.msra.mxu0 0.0
        %506 = vmatpush.msra.mxu0 0.0
        %507 = vmatpush.msra.mxu0 0.0
        %508 = vmatpush.msra.mxu0 0.0
        %509 = vmatpush.msra.mxu0 0.0
        %510 = vmatpush.msra.mxu0 0.0
        %511 = vmatpush.msra.mxu0 0.0
        %512 = vmatpush.msra.mxu0 0.0
        %513 = vmatpush.msra.mxu0 0.0
        %514 = vmatpush.msra.mxu0 0.0
        %515 = vmatpush.msra.mxu0 0.0
        %516 = vmatpush.msra.mxu0 %v503
        %517 = vmatpush.msra.mxu0 %v502
        %518 = vmatpush.msra.mxu0 %v501
        %519 = vmatpush.msra.mxu0 %v500
        %520 = vmatmul.f32.gmra.mxu0 %v273
        %v521 = vpop.f32.mrf.mxu0
        %v522 = vadd.f32 0.0, %v521
        %523 = vdwg.mxu0
        %v525 = vsel %vm343, %v472, 0
        %v528 = vsel %vm343, %v497, 0
        %530 = vmatpush.xpose.msra.mxu0 0.0
        %531 = vmatpush.xpose.msra.mxu0 0.0
        %532 = vmatpush.xpose.msra.mxu0 0.0
        %533 = vmatpush.xpose.msra.mxu0 0.0
        %534 = vmatpush.xpose.msra.mxu0 0.0
        %535 = vmatpush.xpose.msra.mxu0 0.0
        %536 = vmatpush.xpose.msra.mxu0 0.0
        %537 = vmatpush.xpose.msra.mxu0 0.0
        %538 = vmatpush.xpose.msra.mxu0 0.0
        %539 = vmatpush.xpose.msra.mxu0 0.0
        %540 = vmatpush.xpose.msra.mxu0 0.0
        %541 = vmatpush.xpose.msra.mxu0 0.0
        %542 = vmatpush.xpose.msra.mxu0 0.0
        %543 = vmatpush.xpose.msra.mxu0 0.0
        %544 = vmatpush.xpose.msra.mxu0 0.0
        %545 = vmatpush.xpose.msra.mxu0 %v528
        %546 = vmatmul.f32.gmra.mxu0 %v525
        %v547 = vpop.f32.mrf.mxu0
        %v548 = vadd.f32 0.0, %v547
        %549 = vdwg.mxu0
        %v550 = vsel %vm370, %v548, -inf
        %551 = vmax.xlane.f32.xlu0 %v550
        %v552 = vpop.xlane.xlu0 %551
        %v553 = vsub.f32 %v548, %v552
        %v554 = vmul.f32 %v553, 1.442695
        %v555 = vpow.pop %v554
        %v556 = vsel %vm370, %v555, 0.0
        %557 = vadd.xlane.f32.xlu0 %v556
        %v558 = vpop.xlane.xlu0 %557
        %v560 = vsel %vm370, %v555, 0
        %562 = vmatpush.msra.mxu0 0.0
        %563 = vmatpush.msra.mxu0 0.0
        %564 = vmatpush.msra.mxu0 0.0
        %565 = vmatpush.msra.mxu0 0.0
        %566 = vmatpush.msra.mxu0 0.0
        %567 = vmatpush.msra.mxu0 0.0
        %568 = vmatpush.msra.mxu0 0.0
        %569 = vmatpush.msra.mxu0 0.0
        %570 = vmatpush.msra.mxu0 0.0
        %571 = vmatpush.msra.mxu0 0.0
        %572 = vmatpush.msra.mxu0 0.0
        %573 = vmatpush.msra.mxu0 0.0
        %574 = vmatpush.msra.mxu0 0.0
        %575 = vmatpush.msra.mxu0 0.0
        %576 = vmatpush.msra.mxu0 0.0
        %577 = vmatpush.msra.mxu0 %v522
        %578 = vmatmul.f32.gmra.mxu0 %v560
        %v579 = vpop.f32.mrf.mxu0
        %v580 = vadd.f32 0.0, %v579
        %581 = vdwg.mxu0
        %v582 = vrcp.pop %v558
        %v583 = vmul.f32 %v558, %v582
        %v584 = vsub.f32 1.0, %v583
        %v585 = vmul.f32 %v582, %v584
        %v586 = vadd.f32 %v582, %v585
        %vm587 = vweird.f32 %v558
        %vm588 = vweird.f32 %v582
        %vm589 = vmor %vm587, %vm588
        %v590 = vsel %vm589, %v582, %v586
        %v591 = vand.u32 2147483647, %v558
        %vm592 = vcmp.eq.f32.partialorder %v591, 8.507059e+37
        %v593 = vand.u32 %v558, 2147483648
        %v594 = vor.u32 1.1754944e-38, %v593
        %v595 = vsel %vm592, %v594, %v590
        %v596 = vmul.f32 %v580, %v595
        %v597 = vld [vmem:[#allocation2] sm:$0xff]
        %s598 = scalar_lea.vmem %s4, 4
        %v599 = vld [vmem:[%s598] sm:$0xf]
        %v601 = vsel %vm343, %v596, 0
        %v604 = vsel %vm423, %v599, 0
        %606 = vmatpush.msra.mxu0 0.0
        %607 = vmatpush.msra.mxu0 0.0
        %608 = vmatpush.msra.mxu0 0.0
        %609 = vmatpush.msra.mxu0 0.0
        %610 = vmatpush.msra.mxu0 0.0
        %611 = vmatpush.msra.mxu0 0.0
        %612 = vmatpush.msra.mxu0 0.0
        %613 = vmatpush.msra.mxu0 0.0
        %614 = vmatpush.msra.mxu0 0.0
        %615 = vmatpush.msra.mxu0 0.0
        %616 = vmatpush.msra.mxu0 0.0
        %617 = vmatpush.msra.mxu0 0.0
        %618 = vmatpush.msra.mxu0 0.0
        %619 = vmatpush.msra.mxu0 0.0
        %620 = vmatpush.msra.mxu0 0.0
        %621 = vmatpush.msra.mxu0 %v604
        %622 = vmatmul.f32.gmra.mxu0 %v601
        %v623 = vpop.f32.mrf.mxu0
        %v624 = vadd.f32 0.0, %v623
        %625 = vdwg.mxu0
        %v626 = vadd.f32 %v597, %v624
        %627 = vst.msk [vmem:[#allocation2] sm:$0xff] %vm266, %v626
        %s628 = scalar_lea.vmem %s1, 64
        %v629 = vld [vmem:[%s628] sm:$0xff]
        %v630 = vld [vmem:[%s628 + $0x8] sm:$0xff]
        %v631 = vld [vmem:[%s628 + $0x10] sm:$0xff]
        %v632 = vld [vmem:[%s628 + $0x18] sm:$0xff]
        %633 = vmatpush.msra.mxu0 0.0
        %634 = vmatpush.msra.mxu0 0.0
        %635 = vmatpush.msra.mxu0 0.0
        %636 = vmatpush.msra.mxu0 0.0
        %637 = vmatpush.msra.mxu0 0.0
        %638 = vmatpush.msra.mxu0 0.0
        %639 = vmatpush.msra.mxu0 0.0
        %640 = vmatpush.msra.mxu0 0.0
        %641 = vmatpush.msra.mxu0 0.0
        %642 = vmatpush.msra.mxu0 0.0
        %643 = vmatpush.msra.mxu0 0.0
        %644 = vmatpush.msra.mxu0 0.0
        %645 = vmatpush.msra.mxu0 %v632
        %646 = vmatpush.msra.mxu0 %v631
        %647 = vmatpush.msra.mxu0 %v630
        %648 = vmatpush.msra.mxu0 %v629
        %649 = vmatmul.f32.gmra.mxu0 %v273
        %v650 = vpop.f32.mrf.mxu0
        %v651 = vadd.f32 0.0, %v650
        %652 = vdwg.mxu0
        %s653 = scalar_lea.vmem %s2, 64
        %v654 = vld [vmem:[%s653] sm:$0xff]
        %v655 = vld [vmem:[%s653 + $0x8] sm:$0xff]
        %v656 = vld [vmem:[%s653 + $0x10] sm:$0xff]
        %v657 = vld [vmem:[%s653 + $0x18] sm:$0xff]
        %658 = vmatpush.msra.mxu0 0.0
        %659 = vmatpush.msra.mxu0 0.0
        %660 = vmatpush.msra.mxu0 0.0
        %661 = vmatpush.msra.mxu0 0.0
        %662 = vmatpush.msra.mxu0 0.0
        %663 = vmatpush.msra.mxu0 0.0
        %664 = vmatpush.msra.mxu0 0.0
        %665 = vmatpush.msra.mxu0 0.0
        %666 = vmatpush.msra.mxu0 0.0
        %667 = vmatpush.msra.mxu0 0.0
        %668 = vmatpush.msra.mxu0 0.0
        %669 = vmatpush.msra.mxu0 0.0
        %670 = vmatpush.msra.mxu0 %v657
        %671 = vmatpush.msra.mxu0 %v656
        %672 = vmatpush.msra.mxu0 %v655
        %673 = vmatpush.msra.mxu0 %v654
        %674 = vmatmul.f32.gmra.mxu0 %v273
        %v675 = vpop.f32.mrf.mxu0
        %v676 = vadd.f32 0.0, %v675
        %677 = vdwg.mxu0
        %s678 = scalar_lea.vmem %s3, 64
        %v679 = vld [vmem:[%s678] sm:$0xff]
        %v680 = vld [vmem:[%s678 + $0x8] sm:$0xff]
        %v681 = vld [vmem:[%s678 + $0x10] sm:$0xff]
        %v682 = vld [vmem:[%s678 + $0x18] sm:$0xff]
        %683 = vmatpush.msra.mxu0 0.0
        %684 = vmatpush.msra.mxu0 0.0
        %685 = vmatpush.msra.mxu0 0.0
        %686 = vmatpush.msra.mxu0 0.0
        %687 = vmatpush.msra.mxu0 0.0
        %688 = vmatpush.msra.mxu0 0.0
        %689 = vmatpush.msra.mxu0 0.0
        %690 = vmatpush.msra.mxu0 0.0
        %691 = vmatpush.msra.mxu0 0.0
        %692 = vmatpush.msra.mxu0 0.0
        %693 = vmatpush.msra.mxu0 0.0
        %694 = vmatpush.msra.mxu0 0.0
        %695 = vmatpush.msra.mxu0 %v682
        %696 = vmatpush.msra.mxu0 %v681
        %697 = vmatpush.msra.mxu0 %v680
        %698 = vmatpush.msra.mxu0 %v679
        %699 = vmatmul.f32.gmra.mxu0 %v273
        %v700 = vpop.f32.mrf.mxu0
        %v701 = vadd.f32 0.0, %v700
        %702 = vdwg.mxu0
        %v704 = vsel %vm343, %v651, 0
        %v707 = vsel %vm343, %v676, 0
        %709 = vmatpush.xpose.msra.mxu0 0.0
        %710 = vmatpush.xpose.msra.mxu0 0.0
        %711 = vmatpush.xpose.msra.mxu0 0.0
        %712 = vmatpush.xpose.msra.mxu0 0.0
        %713 = vmatpush.xpose.msra.mxu0 0.0
        %714 = vmatpush.xpose.msra.mxu0 0.0
        %715 = vmatpush.xpose.msra.mxu0 0.0
        %716 = vmatpush.xpose.msra.mxu0 0.0
        %717 = vmatpush.xpose.msra.mxu0 0.0
        %718 = vmatpush.xpose.msra.mxu0 0.0
        %719 = vmatpush.xpose.msra.mxu0 0.0
        %720 = vmatpush.xpose.msra.mxu0 0.0
        %721 = vmatpush.xpose.msra.mxu0 0.0
        %722 = vmatpush.xpose.msra.mxu0 0.0
        %723 = vmatpush.xpose.msra.mxu0 0.0
        %724 = vmatpush.xpose.msra.mxu0 %v707
        %725 = vmatmul.f32.gmra.mxu0 %v704
        %v726 = vpop.f32.mrf.mxu0
        %v727 = vadd.f32 0.0, %v726
        %728 = vdwg.mxu0
        %v729 = vsel %vm370, %v727, -inf
        %730 = vmax.xlane.f32.xlu0 %v729
        %v731 = vpop.xlane.xlu0 %730
        %v732 = vsub.f32 %v727, %v731
        %v733 = vmul.f32 %v732, 1.442695
        %v734 = vpow.pop %v733
        %v735 = vsel %vm370, %v734, 0.0
        %736 = vadd.xlane.f32.xlu0 %v735
        %v737 = vpop.xlane.xlu0 %736
        %v739 = vsel %vm370, %v734, 0
        %741 = vmatpush.msra.mxu0 0.0
        %742 = vmatpush.msra.mxu0 0.0
        %743 = vmatpush.msra.mxu0 0.0
        %744 = vmatpush.msra.mxu0 0.0
        %745 = vmatpush.msra.mxu0 0.0
        %746 = vmatpush.msra.mxu0 0.0
        %747 = vmatpush.msra.mxu0 0.0
        %748 = vmatpush.msra.mxu0 0.0
        %749 = vmatpush.msra.mxu0 0.0
        %750 = vmatpush.msra.mxu0 0.0
        %751 = vmatpush.msra.mxu0 0.0
        %752 = vmatpush.msra.mxu0 0.0
        %753 = vmatpush.msra.mxu0 0.0
        %754 = vmatpush.msra.mxu0 0.0
        %755 = vmatpush.msra.mxu0 0.0
        %756 = vmatpush.msra.mxu0 %v701
        %757 = vmatmul.f32.gmra.mxu0 %v739
        %v758 = vpop.f32.mrf.mxu0
        %v759 = vadd.f32 0.0, %v758
        %760 = vdwg.mxu0
        %v761 = vrcp.pop %v737
        %v762 = vmul.f32 %v737, %v761
        %v763 = vsub.f32 1.0, %v762
        %v764 = vmul.f32 %v761, %v763
        %v765 = vadd.f32 %v761, %v764
        %vm766 = vweird.f32 %v737
        %vm767 = vweird.f32 %v761
        %vm768 = vmor %vm766, %vm767
        %v769 = vsel %vm768, %v761, %v765
        %v770 = vand.u32 2147483647, %v737
        %vm771 = vcmp.eq.f32.partialorder %v770, 8.507059e+37
        %v772 = vand.u32 %v737, 2147483648
        %v773 = vor.u32 1.1754944e-38, %v772
        %v774 = vsel %vm771, %v773, %v769
        %v775 = vmul.f32 %v759, %v774
        %v776 = vld [vmem:[#allocation2] sm:$0xff]
        %s777 = scalar_lea.vmem %s4, 8
        %v778 = vld [vmem:[%s777] sm:$0xf]
        %v780 = vsel %vm343, %v775, 0
        %v783 = vsel %vm423, %v778, 0
        %785 = vmatpush.msra.mxu0 0.0
        %786 = vmatpush.msra.mxu0 0.0
        %787 = vmatpush.msra.mxu0 0.0
        %788 = vmatpush.msra.mxu0 0.0
        %789 = vmatpush.msra.mxu0 0.0
        %790 = vmatpush.msra.mxu0 0.0
        %791 = vmatpush.msra.mxu0 0.0
        %792 = vmatpush.msra.mxu0 0.0
        %793 = vmatpush.msra.mxu0 0.0
        %794 = vmatpush.msra.mxu0 0.0
        %795 = vmatpush.msra.mxu0 0.0
        %796 = vmatpush.msra.mxu0 0.0
        %797 = vmatpush.msra.mxu0 0.0
        %798 = vmatpush.msra.mxu0 0.0
        %799 = vmatpush.msra.mxu0 0.0
        %800 = vmatpush.msra.mxu0 %v783
        %801 = vmatmul.f32.gmra.mxu0 %v780
        %v802 = vpop.f32.mrf.mxu0
        %v803 = vadd.f32 0.0, %v802
        %804 = vdwg.mxu0
        %v805 = vadd.f32 %v776, %v803
        %806 = vst.msk [vmem:[#allocation2] sm:$0xff] %vm266, %v805
        %s807 = scalar_lea.vmem %s1, 96
        %v808 = vld [vmem:[%s807] sm:$0xff]
        %v809 = vld [vmem:[%s807 + $0x8] sm:$0xff]
        %v810 = vld [vmem:[%s807 + $0x10] sm:$0xff]
        %v811 = vld [vmem:[%s807 + $0x18] sm:$0xff]
        %812 = vmatpush.msra.mxu0 0.0
        %813 = vmatpush.msra.mxu0 0.0
        %814 = vmatpush.msra.mxu0 0.0
        %815 = vmatpush.msra.mxu0 0.0
        %816 = vmatpush.msra.mxu0 0.0
        %817 = vmatpush.msra.mxu0 0.0
        %818 = vmatpush.msra.mxu0 0.0
        %819 = vmatpush.msra.mxu0 0.0
        %820 = vmatpush.msra.mxu0 0.0
        %821 = vmatpush.msra.mxu0 0.0
        %822 = vmatpush.msra.mxu0 0.0
        %823 = vmatpush.msra.mxu0 0.0
        %824 = vmatpush.msra.mxu0 %v811
        %825 = vmatpush.msra.mxu0 %v810
        %826 = vmatpush.msra.mxu0 %v809
        %827 = vmatpush.msra.mxu0 %v808
        %828 = vmatmul.f32.gmra.mxu0 %v273
        %v829 = vpop.f32.mrf.mxu0
        %v830 = vadd.f32 0.0, %v829
        %831 = vdwg.mxu0
        %s832 = scalar_lea.vmem %s2, 96
        %v833 = vld [vmem:[%s832] sm:$0xff]
        %v834 = vld [vmem:[%s832 + $0x8] sm:$0xff]
        %v835 = vld [vmem:[%s832 + $0x10] sm:$0xff]
        %v836 = vld [vmem:[%s832 + $0x18] sm:$0xff]
        %837 = vmatpush.msra.mxu0 0.0
        %838 = vmatpush.msra.mxu0 0.0
        %839 = vmatpush.msra.mxu0 0.0
        %840 = vmatpush.msra.mxu0 0.0
        %841 = vmatpush.msra.mxu0 0.0
        %842 = vmatpush.msra.mxu0 0.0
        %843 = vmatpush.msra.mxu0 0.0
        %844 = vmatpush.msra.mxu0 0.0
        %845 = vmatpush.msra.mxu0 0.0
        %846 = vmatpush.msra.mxu0 0.0
        %847 = vmatpush.msra.mxu0 0.0
        %848 = vmatpush.msra.mxu0 0.0
        %849 = vmatpush.msra.mxu0 %v836
        %850 = vmatpush.msra.mxu0 %v835
        %851 = vmatpush.msra.mxu0 %v834
        %852 = vmatpush.msra.mxu0 %v833
        %853 = vmatmul.f32.gmra.mxu0 %v273
        %v854 = vpop.f32.mrf.mxu0
        %v855 = vadd.f32 0.0, %v854
        %856 = vdwg.mxu0
        %s857 = scalar_lea.vmem %s3, 96
        %v858 = vld [vmem:[%s857] sm:$0xff]
        %v859 = vld [vmem:[%s857 + $0x8] sm:$0xff]
        %v860 = vld [vmem:[%s857 + $0x10] sm:$0xff]
        %v861 = vld [vmem:[%s857 + $0x18] sm:$0xff]
        %862 = vmatpush.msra.mxu0 0.0
        %863 = vmatpush.msra.mxu0 0.0
        %864 = vmatpush.msra.mxu0 0.0
        %865 = vmatpush.msra.mxu0 0.0
        %866 = vmatpush.msra.mxu0 0.0
        %867 = vmatpush.msra.mxu0 0.0
        %868 = vmatpush.msra.mxu0 0.0
        %869 = vmatpush.msra.mxu0 0.0
        %870 = vmatpush.msra.mxu0 0.0
        %871 = vmatpush.msra.mxu0 0.0
        %872 = vmatpush.msra.mxu0 0.0
        %873 = vmatpush.msra.mxu0 0.0
        %874 = vmatpush.msra.mxu0 %v861
        %875 = vmatpush.msra.mxu0 %v860
        %876 = vmatpush.msra.mxu0 %v859
        %877 = vmatpush.msra.mxu0 %v858
        %878 = vmatmul.f32.gmra.mxu0 %v273
        %v879 = vpop.f32.mrf.mxu0
        %v880 = vadd.f32 0.0, %v879
        %881 = vdwg.mxu0
        %v883 = vsel %vm343, %v830, 0
        %v886 = vsel %vm343, %v855, 0
        %888 = vmatpush.xpose.msra.mxu0 0.0
        %889 = vmatpush.xpose.msra.mxu0 0.0
        %890 = vmatpush.xpose.msra.mxu0 0.0
        %891 = vmatpush.xpose.msra.mxu0 0.0
        %892 = vmatpush.xpose.msra.mxu0 0.0
        %893 = vmatpush.xpose.msra.mxu0 0.0
        %894 = vmatpush.xpose.msra.mxu0 0.0
        %895 = vmatpush.xpose.msra.mxu0 0.0
        %896 = vmatpush.xpose.msra.mxu0 0.0
        %897 = vmatpush.xpose.msra.mxu0 0.0
        %898 = vmatpush.xpose.msra.mxu0 0.0
        %899 = vmatpush.xpose.msra.mxu0 0.0
        %900 = vmatpush.xpose.msra.mxu0 0.0
        %901 = vmatpush.xpose.msra.mxu0 0.0
        %902 = vmatpush.xpose.msra.mxu0 0.0
        %903 = vmatpush.xpose.msra.mxu0 %v886
        %904 = vmatmul.f32.gmra.mxu0 %v883
        %v905 = vpop.f32.mrf.mxu0
        %v906 = vadd.f32 0.0, %v905
        %907 = vdwg.mxu0
        %v908 = vsel %vm370, %v906, -inf
        %909 = vmax.xlane.f32.xlu0 %v908
        %v910 = vpop.xlane.xlu0 %909
        %v911 = vsub.f32 %v906, %v910
        %v912 = vmul.f32 %v911, 1.442695
        %v913 = vpow.pop %v912
        %v914 = vsel %vm370, %v913, 0.0
        %915 = vadd.xlane.f32.xlu0 %v914
        %v916 = vpop.xlane.xlu0 %915
        %v918 = vsel %vm370, %v913, 0
        %920 = vmatpush.msra.mxu0 0.0
        %921 = vmatpush.msra.mxu0 0.0
        %922 = vmatpush.msra.mxu0 0.0
        %923 = vmatpush.msra.mxu0 0.0
        %924 = vmatpush.msra.mxu0 0.0
        %925 = vmatpush.msra.mxu0 0.0
        %926 = vmatpush.msra.mxu0 0.0
        %927 = vmatpush.msra.mxu0 0.0
        %928 = vmatpush.msra.mxu0 0.0
        %929 = vmatpush.msra.mxu0 0.0
        %930 = vmatpush.msra.mxu0 0.0
        %931 = vmatpush.msra.mxu0 0.0
        %932 = vmatpush.msra.mxu0 0.0
        %933 = vmatpush.msra.mxu0 0.0
        %934 = vmatpush.msra.mxu0 0.0
        %935 = vmatpush.msra.mxu0 %v880
        %936 = vmatmul.f32.gmra.mxu0 %v918
        %v937 = vpop.f32.mrf.mxu0
        %v938 = vadd.f32 0.0, %v937
        %939 = vdwg.mxu0
        %v940 = vrcp.pop %v916
        %v941 = vmul.f32 %v916, %v940
        %v942 = vsub.f32 1.0, %v941
        %v943 = vmul.f32 %v940, %v942
        %v944 = vadd.f32 %v940, %v943
        %vm945 = vweird.f32 %v916
        %vm946 = vweird.f32 %v940
        %vm947 = vmor %vm945, %vm946
        %v948 = vsel %vm947, %v940, %v944
        %v949 = vand.u32 2147483647, %v916
        %vm950 = vcmp.eq.f32.partialorder %v949, 8.507059e+37
        %v951 = vand.u32 %v916, 2147483648
        %v952 = vor.u32 1.1754944e-38, %v951
        %v953 = vsel %vm950, %v952, %v948
        %v954 = vmul.f32 %v938, %v953
        %v955 = vld [vmem:[#allocation2] sm:$0xff]
        %s956 = scalar_lea.vmem %s4, 12
        %v957 = vld [vmem:[%s956] sm:$0xf]
        %v959 = vsel %vm343, %v954, 0
        %v962 = vsel %vm423, %v957, 0
        %964 = vmatpush.msra.mxu0 0.0
        %965 = vmatpush.msra.mxu0 0.0
        %966 = vmatpush.msra.mxu0 0.0
        %967 = vmatpush.msra.mxu0 0.0
        %968 = vmatpush.msra.mxu0 0.0
        %969 = vmatpush.msra.mxu0 0.0
        %970 = vmatpush.msra.mxu0 0.0
        %971 = vmatpush.msra.mxu0 0.0
        %972 = vmatpush.msra.mxu0 0.0
        %973 = vmatpush.msra.mxu0 0.0
        %974 = vmatpush.msra.mxu0 0.0
        %975 = vmatpush.msra.mxu0 0.0
        %976 = vmatpush.msra.mxu0 0.0
        %977 = vmatpush.msra.mxu0 0.0
        %978 = vmatpush.msra.mxu0 0.0
        %979 = vmatpush.msra.mxu0 %v962
        %980 = vmatmul.f32.gmra.mxu0 %v959
        %v981 = vpop.f32.mrf.mxu0
        %v982 = vadd.f32 0.0, %v981
        %983 = vdwg.mxu0
        %v984 = vadd.f32 %v955, %v982
        %985 = vst.msk [vmem:[#allocation2] sm:$0xff] %vm266, %v984
        %s986 = scalar_lea.vmem %s1, 128
        %v987 = vld [vmem:[%s986] sm:$0xff]
        %v988 = vld [vmem:[%s986 + $0x8] sm:$0xff]
        %v989 = vld [vmem:[%s986 + $0x10] sm:$0xff]
        %v990 = vld [vmem:[%s986 + $0x18] sm:$0xff]
        %991 = vmatpush.msra.mxu0 0.0
        %992 = vmatpush.msra.mxu0 0.0
        %993 = vmatpush.msra.mxu0 0.0
        %994 = vmatpush.msra.mxu0 0.0
        %995 = vmatpush.msra.mxu0 0.0
        %996 = vmatpush.msra.mxu0 0.0
        %997 = vmatpush.msra.mxu0 0.0
        %998 = vmatpush.msra.mxu0 0.0
        %999 = vmatpush.msra.mxu0 0.0
        %1000 = vmatpush.msra.mxu0 0.0
        %1001 = vmatpush.msra.mxu0 0.0
        %1002 = vmatpush.msra.mxu0 0.0
        %1003 = vmatpush.msra.mxu0 %v990
        %1004 = vmatpush.msra.mxu0 %v989
        %1005 = vmatpush.msra.mxu0 %v988
        %1006 = vmatpush.msra.mxu0 %v987
        %1007 = vmatmul.f32.gmra.mxu0 %v273
        %v1008 = vpop.f32.mrf.mxu0
        %v1009 = vadd.f32 0.0, %v1008
        %1010 = vdwg.mxu0
        %s1011 = scalar_lea.vmem %s2, 128
        %v1012 = vld [vmem:[%s1011] sm:$0xff]
        %v1013 = vld [vmem:[%s1011 + $0x8] sm:$0xff]
        %v1014 = vld [vmem:[%s1011 + $0x10] sm:$0xff]
        %v1015 = vld [vmem:[%s1011 + $0x18] sm:$0xff]
        %1016 = vmatpush.msra.mxu0 0.0
        %1017 = vmatpush.msra.mxu0 0.0
        %1018 = vmatpush.msra.mxu0 0.0
        %1019 = vmatpush.msra.mxu0 0.0
        %1020 = vmatpush.msra.mxu0 0.0
        %1021 = vmatpush.msra.mxu0 0.0
        %1022 = vmatpush.msra.mxu0 0.0
        %1023 = vmatpush.msra.mxu0 0.0
        %1024 = vmatpush.msra.mxu0 0.0
        %1025 = vmatpush.msra.mxu0 0.0
        %1026 = vmatpush.msra.mxu0 0.0
        %1027 = vmatpush.msra.mxu0 0.0
        %1028 = vmatpush.msra.mxu0 %v1015
        %1029 = vmatpush.msra.mxu0 %v1014
        %1030 = vmatpush.msra.mxu0 %v1013
        %1031 = vmatpush.msra.mxu0 %v1012
        %1032 = vmatmul.f32.gmra.mxu0 %v273
        %v1033 = vpop.f32.mrf.mxu0
        %v1034 = vadd.f32 0.0, %v1033
        %1035 = vdwg.mxu0
        %s1036 = scalar_lea.vmem %s3, 128
        %v1037 = vld [vmem:[%s1036] sm:$0xff]
        %v1038 = vld [vmem:[%s1036 + $0x8] sm:$0xff]
        %v1039 = vld [vmem:[%s1036 + $0x10] sm:$0xff]
        %v1040 = vld [vmem:[%s1036 + $0x18] sm:$0xff]
        %1041 = vmatpush.msra.mxu0 0.0
        %1042 = vmatpush.msra.mxu0 0.0
        %1043 = vmatpush.msra.mxu0 0.0
        %1044 = vmatpush.msra.mxu0 0.0
        %1045 = vmatpush.msra.mxu0 0.0
        %1046 = vmatpush.msra.mxu0 0.0
        %1047 = vmatpush.msra.mxu0 0.0
        %1048 = vmatpush.msra.mxu0 0.0
        %1049 = vmatpush.msra.mxu0 0.0
        %1050 = vmatpush.msra.mxu0 0.0
        %1051 = vmatpush.msra.mxu0 0.0
        %1052 = vmatpush.msra.mxu0 0.0
        %1053 = vmatpush.msra.mxu0 %v1040
        %1054 = vmatpush.msra.mxu0 %v1039
        %1055 = vmatpush.msra.mxu0 %v1038
        %1056 = vmatpush.msra.mxu0 %v1037
        %1057 = vmatmul.f32.gmra.mxu0 %v273
        %v1058 = vpop.f32.mrf.mxu0
        %v1059 = vadd.f32 0.0, %v1058
        %1060 = vdwg.mxu0
        %v1062 = vsel %vm343, %v1009, 0
        %v1065 = vsel %vm343, %v1034, 0
        %1067 = vmatpush.xpose.msra.mxu0 0.0
        %1068 = vmatpush.xpose.msra.mxu0 0.0
        %1069 = vmatpush.xpose.msra.mxu0 0.0
        %1070 = vmatpush.xpose.msra.mxu0 0.0
        %1071 = vmatpush.xpose.msra.mxu0 0.0
        %1072 = vmatpush.xpose.msra.mxu0 0.0
        %1073 = vmatpush.xpose.msra.mxu0 0.0
        %1074 = vmatpush.xpose.msra.mxu0 0.0
        %1075 = vmatpush.xpose.msra.mxu0 0.0
        %1076 = vmatpush.xpose.msra.mxu0 0.0
        %1077 = vmatpush.xpose.msra.mxu0 0.0
        %1078 = vmatpush.xpose.msra.mxu0 0.0
        %1079 = vmatpush.xpose.msra.mxu0 0.0
        %1080 = vmatpush.xpose.msra.mxu0 0.0
        %1081 = vmatpush.xpose.msra.mxu0 0.0
        %1082 = vmatpush.xpose.msra.mxu0 %v1065
        %1083 = vmatmul.f32.gmra.mxu0 %v1062
        %v1084 = vpop.f32.mrf.mxu0
        %v1085 = vadd.f32 0.0, %v1084
        %1086 = vdwg.mxu0
        %v1087 = vsel %vm370, %v1085, -inf
        %1088 = vmax.xlane.f32.xlu0 %v1087
        %v1089 = vpop.xlane.xlu0 %1088
        %v1090 = vsub.f32 %v1085, %v1089
        %v1091 = vmul.f32 %v1090, 1.442695
        %v1092 = vpow.pop %v1091
        %v1093 = vsel %vm370, %v1092, 0.0
        %1094 = vadd.xlane.f32.xlu0 %v1093
        %v1095 = vpop.xlane.xlu0 %1094
        %v1097 = vsel %vm370, %v1092, 0
        %1099 = vmatpush.msra.mxu0 0.0
        %1100 = vmatpush.msra.mxu0 0.0
        %1101 = vmatpush.msra.mxu0 0.0
        %1102 = vmatpush.msra.mxu0 0.0
        %1103 = vmatpush.msra.mxu0 0.0
        %1104 = vmatpush.msra.mxu0 0.0
        %1105 = vmatpush.msra.mxu0 0.0
        %1106 = vmatpush.msra.mxu0 0.0
        %1107 = vmatpush.msra.mxu0 0.0
        %1108 = vmatpush.msra.mxu0 0.0
        %1109 = vmatpush.msra.mxu0 0.0
        %1110 = vmatpush.msra.mxu0 0.0
        %1111 = vmatpush.msra.mxu0 0.0
        %1112 = vmatpush.msra.mxu0 0.0
        %1113 = vmatpush.msra.mxu0 0.0
        %1114 = vmatpush.msra.mxu0 %v1059
        %1115 = vmatmul.f32.gmra.mxu0 %v1097
        %v1116 = vpop.f32.mrf.mxu0
        %v1117 = vadd.f32 0.0, %v1116
        %1118 = vdwg.mxu0
        %v1119 = vrcp.pop %v1095
        %v1120 = vmul.f32 %v1095, %v1119
        %v1121 = vsub.f32 1.0, %v1120
        %v1122 = vmul.f32 %v1119, %v1121
        %v1123 = vadd.f32 %v1119, %v1122
        %vm1124 = vweird.f32 %v1095
        %vm1125 = vweird.f32 %v1119
        %vm1126 = vmor %vm1124, %vm1125
        %v1127 = vsel %vm1126, %v1119, %v1123
        %v1128 = vand.u32 2147483647, %v1095
        %vm1129 = vcmp.eq.f32.partialorder %v1128, 8.507059e+37
        %v1130 = vand.u32 %v1095, 2147483648
        %v1131 = vor.u32 1.1754944e-38, %v1130
        %v1132 = vsel %vm1129, %v1131, %v1127
        %v1133 = vmul.f32 %v1117, %v1132
        %v1134 = vld [vmem:[#allocation2] sm:$0xff]
        %s1135 = scalar_lea.vmem %s4, 16
        %v1136 = vld [vmem:[%s1135] sm:$0xf]
        %v1138 = vsel %vm343, %v1133, 0
        %v1141 = vsel %vm423, %v1136, 0
        %1143 = vmatpush.msra.mxu0 0.0
        %1144 = vmatpush.msra.mxu0 0.0
        %1145 = vmatpush.msra.mxu0 0.0
        %1146 = vmatpush.msra.mxu0 0.0
        %1147 = vmatpush.msra.mxu0 0.0
        %1148 = vmatpush.msra.mxu0 0.0
        %1149 = vmatpush.msra.mxu0 0.0
        %1150 = vmatpush.msra.mxu0 0.0
        %1151 = vmatpush.msra.mxu0 0.0
        %1152 = vmatpush.msra.mxu0 0.0
        %1153 = vmatpush.msra.mxu0 0.0
        %1154 = vmatpush.msra.mxu0 0.0
        %1155 = vmatpush.msra.mxu0 0.0
        %1156 = vmatpush.msra.mxu0 0.0
        %1157 = vmatpush.msra.mxu0 0.0
        %1158 = vmatpush.msra.mxu0 %v1141
        %1159 = vmatmul.f32.gmra.mxu0 %v1138
        %v1160 = vpop.f32.mrf.mxu0
        %v1161 = vadd.f32 0.0, %v1160
        %1162 = vdwg.mxu0
        %v1163 = vadd.f32 %v1134, %v1161
        %1164 = vst.msk [vmem:[#allocation2] sm:$0xff] %vm266, %v1163
        %s1165 = scalar_lea.vmem %s1, 160
        %v1166 = vld [vmem:[%s1165] sm:$0xff]
        %v1167 = vld [vmem:[%s1165 + $0x8] sm:$0xff]
        %v1168 = vld [vmem:[%s1165 + $0x10] sm:$0xff]
        %v1169 = vld [vmem:[%s1165 + $0x18] sm:$0xff]
        %1170 = vmatpush.msra.mxu0 0.0
        %1171 = vmatpush.msra.mxu0 0.0
        %1172 = vmatpush.msra.mxu0 0.0
        %1173 = vmatpush.msra.mxu0 0.0
        %1174 = vmatpush.msra.mxu0 0.0
        %1175 = vmatpush.msra.mxu0 0.0
        %1176 = vmatpush.msra.mxu0 0.0
        %1177 = vmatpush.msra.mxu0 0.0
        %1178 = vmatpush.msra.mxu0 0.0
        %1179 = vmatpush.msra.mxu0 0.0
        %1180 = vmatpush.msra.mxu0 0.0
        %1181 = vmatpush.msra.mxu0 0.0
        %1182 = vmatpush.msra.mxu0 %v1169
        %1183 = vmatpush.msra.mxu0 %v1168
        %1184 = vmatpush.msra.mxu0 %v1167
        %1185 = vmatpush.msra.mxu0 %v1166
        %1186 = vmatmul.f32.gmra.mxu0 %v273
        %v1187 = vpop.f32.mrf.mxu0
        %v1188 = vadd.f32 0.0, %v1187
        %1189 = vdwg.mxu0
        %s1190 = scalar_lea.vmem %s2, 160
        %v1191 = vld [vmem:[%s1190] sm:$0xff]
        %v1192 = vld [vmem:[%s1190 + $0x8] sm:$0xff]
        %v1193 = vld [vmem:[%s1190 + $0x10] sm:$0xff]
        %v1194 = vld [vmem:[%s1190 + $0x18] sm:$0xff]
        %1195 = vmatpush.msra.mxu0 0.0
        %1196 = vmatpush.msra.mxu0 0.0
        %1197 = vmatpush.msra.mxu0 0.0
        %1198 = vmatpush.msra.mxu0 0.0
        %1199 = vmatpush.msra.mxu0 0.0
        %1200 = vmatpush.msra.mxu0 0.0
        %1201 = vmatpush.msra.mxu0 0.0
        %1202 = vmatpush.msra.mxu0 0.0
        %1203 = vmatpush.msra.mxu0 0.0
        %1204 = vmatpush.msra.mxu0 0.0
        %1205 = vmatpush.msra.mxu0 0.0
        %1206 = vmatpush.msra.mxu0 0.0
        %1207 = vmatpush.msra.mxu0 %v1194
        %1208 = vmatpush.msra.mxu0 %v1193
        %1209 = vmatpush.msra.mxu0 %v1192
        %1210 = vmatpush.msra.mxu0 %v1191
        %1211 = vmatmul.f32.gmra.mxu0 %v273
        %v1212 = vpop.f32.mrf.mxu0
        %v1213 = vadd.f32 0.0, %v1212
        %1214 = vdwg.mxu0
        %s1215 = scalar_lea.vmem %s3, 160
        %v1216 = vld [vmem:[%s1215] sm:$0xff]
        %v1217 = vld [vmem:[%s1215 + $0x8] sm:$0xff]
        %v1218 = vld [vmem:[%s1215 + $0x10] sm:$0xff]
        %v1219 = vld [vmem:[%s1215 + $0x18] sm:$0xff]
        %1220 = vmatpush.msra.mxu0 0.0
        %1221 = vmatpush.msra.mxu0 0.0
        %1222 = vmatpush.msra.mxu0 0.0
        %1223 = vmatpush.msra.mxu0 0.0
        %1224 = vmatpush.msra.mxu0 0.0
        %1225 = vmatpush.msra.mxu0 0.0
        %1226 = vmatpush.msra.mxu0 0.0
        %1227 = vmatpush.msra.mxu0 0.0
        %1228 = vmatpush.msra.mxu0 0.0
        %1229 = vmatpush.msra.mxu0 0.0
        %1230 = vmatpush.msra.mxu0 0.0
        %1231 = vmatpush.msra.mxu0 0.0
        %1232 = vmatpush.msra.mxu0 %v1219
        %1233 = vmatpush.msra.mxu0 %v1218
        %1234 = vmatpush.msra.mxu0 %v1217
        %1235 = vmatpush.msra.mxu0 %v1216
        %1236 = vmatmul.f32.gmra.mxu0 %v273
        %v1237 = vpop.f32.mrf.mxu0
        %v1238 = vadd.f32 0.0, %v1237
        %1239 = vdwg.mxu0
        %v1241 = vsel %vm343, %v1188, 0
        %v1244 = vsel %vm343, %v1213, 0
        %1246 = vmatpush.xpose.msra.mxu0 0.0
        %1247 = vmatpush.xpose.msra.mxu0 0.0
        %1248 = vmatpush.xpose.msra.mxu0 0.0
        %1249 = vmatpush.xpose.msra.mxu0 0.0
        %1250 = vmatpush.xpose.msra.mxu0 0.0
        %1251 = vmatpush.xpose.msra.mxu0 0.0
        %1252 = vmatpush.xpose.msra.mxu0 0.0
        %1253 = vmatpush.xpose.msra.mxu0 0.0
        %1254 = vmatpush.xpose.msra.mxu0 0.0
        %1255 = vmatpush.xpose.msra.mxu0 0.0
        %1256 = vmatpush.xpose.msra.mxu0 0.0
        %1257 = vmatpush.xpose.msra.mxu0 0.0
        %1258 = vmatpush.xpose.msra.mxu0 0.0
        %1259 = vmatpush.xpose.msra.mxu0 0.0
        %1260 = vmatpush.xpose.msra.mxu0 0.0
        %1261 = vmatpush.xpose.msra.mxu0 %v1244
        %1262 = vmatmul.f32.gmra.mxu0 %v1241
        %v1263 = vpop.f32.mrf.mxu0
        %v1264 = vadd.f32 0.0, %v1263
        %1265 = vdwg.mxu0
        %v1266 = vsel %vm370, %v1264, -inf
        %1267 = vmax.xlane.f32.xlu0 %v1266
        %v1268 = vpop.xlane.xlu0 %1267
        %v1269 = vsub.f32 %v1264, %v1268
        %v1270 = vmul.f32 %v1269, 1.442695
        %v1271 = vpow.pop %v1270
        %v1272 = vsel %vm370, %v1271, 0.0
        %1273 = vadd.xlane.f32.xlu0 %v1272
        %v1274 = vpop.xlane.xlu0 %1273
        %v1276 = vsel %vm370, %v1271, 0
        %1278 = vmatpush.msra.mxu0 0.0
        %1279 = vmatpush.msra.mxu0 0.0
        %1280 = vmatpush.msra.mxu0 0.0
        %1281 = vmatpush.msra.mxu0 0.0
        %1282 = vmatpush.msra.mxu0 0.0
        %1283 = vmatpush.msra.mxu0 0.0
        %1284 = vmatpush.msra.mxu0 0.0
        %1285 = vmatpush.msra.mxu0 0.0
        %1286 = vmatpush.msra.mxu0 0.0
        %1287 = vmatpush.msra.mxu0 0.0
        %1288 = vmatpush.msra.mxu0 0.0
        %1289 = vmatpush.msra.mxu0 0.0
        %1290 = vmatpush.msra.mxu0 0.0
        %1291 = vmatpush.msra.mxu0 0.0
        %1292 = vmatpush.msra.mxu0 0.0
        %1293 = vmatpush.msra.mxu0 %v1238
        %1294 = vmatmul.f32.gmra.mxu0 %v1276
        %v1295 = vpop.f32.mrf.mxu0
        %v1296 = vadd.f32 0.0, %v1295
        %1297 = vdwg.mxu0
        %v1298 = vrcp.pop %v1274
        %v1299 = vmul.f32 %v1274, %v1298
        %v1300 = vsub.f32 1.0, %v1299
        %v1301 = vmul.f32 %v1298, %v1300
        %v1302 = vadd.f32 %v1298, %v1301
        %vm1303 = vweird.f32 %v1274
        %vm1304 = vweird.f32 %v1298
        %vm1305 = vmor %vm1303, %vm1304
        %v1306 = vsel %vm1305, %v1298, %v1302
        %v1307 = vand.u32 2147483647, %v1274
        %vm1308 = vcmp.eq.f32.partialorder %v1307, 8.507059e+37
        %v1309 = vand.u32 %v1274, 2147483648
        %v1310 = vor.u32 1.1754944e-38, %v1309
        %v1311 = vsel %vm1308, %v1310, %v1306
        %v1312 = vmul.f32 %v1296, %v1311
        %v1313 = vld [vmem:[#allocation2] sm:$0xff]
        %s1314 = scalar_lea.vmem %s4, 20
        %v1315 = vld [vmem:[%s1314] sm:$0xf]
        %v1317 = vsel %vm343, %v1312, 0
        %v1320 = vsel %vm423, %v1315, 0
        %1322 = vmatpush.msra.mxu0 0.0
        %1323 = vmatpush.msra.mxu0 0.0
        %1324 = vmatpush.msra.mxu0 0.0
        %1325 = vmatpush.msra.mxu0 0.0
        %1326 = vmatpush.msra.mxu0 0.0
        %1327 = vmatpush.msra.mxu0 0.0
        %1328 = vmatpush.msra.mxu0 0.0
        %1329 = vmatpush.msra.mxu0 0.0
        %1330 = vmatpush.msra.mxu0 0.0
        %1331 = vmatpush.msra.mxu0 0.0
        %1332 = vmatpush.msra.mxu0 0.0
        %1333 = vmatpush.msra.mxu0 0.0
        %1334 = vmatpush.msra.mxu0 0.0
        %1335 = vmatpush.msra.mxu0 0.0
        %1336 = vmatpush.msra.mxu0 0.0
        %1337 = vmatpush.msra.mxu0 %v1320
        %1338 = vmatmul.f32.gmra.mxu0 %v1317
        %v1339 = vpop.f32.mrf.mxu0
        %v1340 = vadd.f32 0.0, %v1339
        %1341 = vdwg.mxu0
        %v1342 = vadd.f32 %v1313, %v1340
        %1343 = vst.msk [vmem:[#allocation2] sm:$0xff] %vm266, %v1342
        %s1344 = scalar_lea.vmem %s1, 192
        %v1345 = vld [vmem:[%s1344] sm:$0xff]
        %v1346 = vld [vmem:[%s1344 + $0x8] sm:$0xff]
        %v1347 = vld [vmem:[%s1344 + $0x10] sm:$0xff]
        %v1348 = vld [vmem:[%s1344 + $0x18] sm:$0xff]
        %1349 = vmatpush.msra.mxu0 0.0
        %1350 = vmatpush.msra.mxu0 0.0
        %1351 = vmatpush.msra.mxu0 0.0
        %1352 = vmatpush.msra.mxu0 0.0
        %1353 = vmatpush.msra.mxu0 0.0
        %1354 = vmatpush.msra.mxu0 0.0
        %1355 = vmatpush.msra.mxu0 0.0
        %1356 = vmatpush.msra.mxu0 0.0
        %1357 = vmatpush.msra.mxu0 0.0
        %1358 = vmatpush.msra.mxu0 0.0
        %1359 = vmatpush.msra.mxu0 0.0
        %1360 = vmatpush.msra.mxu0 0.0
        %1361 = vmatpush.msra.mxu0 %v1348
        %1362 = vmatpush.msra.mxu0 %v1347
        %1363 = vmatpush.msra.mxu0 %v1346
        %1364 = vmatpush.msra.mxu0 %v1345
        %1365 = vmatmul.f32.gmra.mxu0 %v273
        %v1366 = vpop.f32.mrf.mxu0
        %v1367 = vadd.f32 0.0, %v1366
        %1368 = vdwg.mxu0
        %s1369 = scalar_lea.vmem %s2, 192
        %v1370 = vld [vmem:[%s1369] sm:$0xff]
        %v1371 = vld [vmem:[%s1369 + $0x8] sm:$0xff]
        %v1372 = vld [vmem:[%s1369 + $0x10] sm:$0xff]
        %v1373 = vld [vmem:[%s1369 + $0x18] sm:$0xff]
        %1374 = vmatpush.msra.mxu0 0.0
        %1375 = vmatpush.msra.mxu0 0.0
        %1376 = vmatpush.msra.mxu0 0.0
        %1377 = vmatpush.msra.mxu0 0.0
        %1378 = vmatpush.msra.mxu0 0.0
        %1379 = vmatpush.msra.mxu0 0.0
        %1380 = vmatpush.msra.mxu0 0.0
        %1381 = vmatpush.msra.mxu0 0.0
        %1382 = vmatpush.msra.mxu0 0.0
        %1383 = vmatpush.msra.mxu0 0.0
        %1384 = vmatpush.msra.mxu0 0.0
        %1385 = vmatpush.msra.mxu0 0.0
        %1386 = vmatpush.msra.mxu0 %v1373
        %1387 = vmatpush.msra.mxu0 %v1372
        %1388 = vmatpush.msra.mxu0 %v1371
        %1389 = vmatpush.msra.mxu0 %v1370
        %1390 = vmatmul.f32.gmra.mxu0 %v273
        %v1391 = vpop.f32.mrf.mxu0
        %v1392 = vadd.f32 0.0, %v1391
        %1393 = vdwg.mxu0
        %s1394 = scalar_lea.vmem %s3, 192
        %v1395 = vld [vmem:[%s1394] sm:$0xff]
        %v1396 = vld [vmem:[%s1394 + $0x8] sm:$0xff]
        %v1397 = vld [vmem:[%s1394 + $0x10] sm:$0xff]
        %v1398 = vld [vmem:[%s1394 + $0x18] sm:$0xff]
        %1399 = vmatpush.msra.mxu0 0.0
        %1400 = vmatpush.msra.mxu0 0.0
        %1401 = vmatpush.msra.mxu0 0.0
        %1402 = vmatpush.msra.mxu0 0.0
        %1403 = vmatpush.msra.mxu0 0.0
        %1404 = vmatpush.msra.mxu0 0.0
        %1405 = vmatpush.msra.mxu0 0.0
        %1406 = vmatpush.msra.mxu0 0.0
        %1407 = vmatpush.msra.mxu0 0.0
        %1408 = vmatpush.msra.mxu0 0.0
        %1409 = vmatpush.msra.mxu0 0.0
        %1410 = vmatpush.msra.mxu0 0.0
        %1411 = vmatpush.msra.mxu0 %v1398
        %1412 = vmatpush.msra.mxu0 %v1397
        %1413 = vmatpush.msra.mxu0 %v1396
        %1414 = vmatpush.msra.mxu0 %v1395
        %1415 = vmatmul.f32.gmra.mxu0 %v273
        %v1416 = vpop.f32.mrf.mxu0
        %v1417 = vadd.f32 0.0, %v1416
        %1418 = vdwg.mxu0
        %v1420 = vsel %vm343, %v1367, 0
        %v1423 = vsel %vm343, %v1392, 0
        %1425 = vmatpush.xpose.msra.mxu0 0.0
        %1426 = vmatpush.xpose.msra.mxu0 0.0
        %1427 = vmatpush.xpose.msra.mxu0 0.0
        %1428 = vmatpush.xpose.msra.mxu0 0.0
        %1429 = vmatpush.xpose.msra.mxu0 0.0
        %1430 = vmatpush.xpose.msra.mxu0 0.0
        %1431 = vmatpush.xpose.msra.mxu0 0.0
        %1432 = vmatpush.xpose.msra.mxu0 0.0
        %1433 = vmatpush.xpose.msra.mxu0 0.0
        %1434 = vmatpush.xpose.msra.mxu0 0.0
        %1435 = vmatpush.xpose.msra.mxu0 0.0
        %1436 = vmatpush.xpose.msra.mxu0 0.0
        %1437 = vmatpush.xpose.msra.mxu0 0.0
        %1438 = vmatpush.xpose.msra.mxu0 0.0
        %1439 = vmatpush.xpose.msra.mxu0 0.0
        %1440 = vmatpush.xpose.msra.mxu0 %v1423
        %1441 = vmatmul.f32.gmra.mxu0 %v1420
        %v1442 = vpop.f32.mrf.mxu0
        %v1443 = vadd.f32 0.0, %v1442
        %1444 = vdwg.mxu0
        %v1445 = vsel %vm370, %v1443, -inf
        %1446 = vmax.xlane.f32.xlu0 %v1445
        %v1447 = vpop.xlane.xlu0 %1446
        %v1448 = vsub.f32 %v1443, %v1447
        %v1449 = vmul.f32 %v1448, 1.442695
        %v1450 = vpow.pop %v1449
        %v1451 = vsel %vm370, %v1450, 0.0
        %1452 = vadd.xlane.f32.xlu0 %v1451
        %v1453 = vpop.xlane.xlu0 %1452
        %v1455 = vsel %vm370, %v1450, 0
        %1457 = vmatpush.msra.mxu0 0.0
        %1458 = vmatpush.msra.mxu0 0.0
        %1459 = vmatpush.msra.mxu0 0.0
        %1460 = vmatpush.msra.mxu0 0.0
        %1461 = vmatpush.msra.mxu0 0.0
        %1462 = vmatpush.msra.mxu0 0.0
        %1463 = vmatpush.msra.mxu0 0.0
        %1464 = vmatpush.msra.mxu0 0.0
        %1465 = vmatpush.msra.mxu0 0.0
        %1466 = vmatpush.msra.mxu0 0.0
        %1467 = vmatpush.msra.mxu0 0.0
        %1468 = vmatpush.msra.mxu0 0.0
        %1469 = vmatpush.msra.mxu0 0.0
        %1470 = vmatpush.msra.mxu0 0.0
        %1471 = vmatpush.msra.mxu0 0.0
        %1472 = vmatpush.msra.mxu0 %v1417
        %1473 = vmatmul.f32.gmra.mxu0 %v1455
        %v1474 = vpop.f32.mrf.mxu0
        %v1475 = vadd.f32 0.0, %v1474
        %1476 = vdwg.mxu0
        %v1477 = vrcp.pop %v1453
        %v1478 = vmul.f32 %v1453, %v1477
        %v1479 = vsub.f32 1.0, %v1478
        %v1480 = vmul.f32 %v1477, %v1479
        %v1481 = vadd.f32 %v1477, %v1480
        %vm1482 = vweird.f32 %v1453
        %vm1483 = vweird.f32 %v1477
        %vm1484 = vmor %vm1482, %vm1483
        %v1485 = vsel %vm1484, %v1477, %v1481
        %v1486 = vand.u32 2147483647, %v1453
        %vm1487 = vcmp.eq.f32.partialorder %v1486, 8.507059e+37
        %v1488 = vand.u32 %v1453, 2147483648
        %v1489 = vor.u32 1.1754944e-38, %v1488
        %v1490 = vsel %vm1487, %v1489, %v1485
        %v1491 = vmul.f32 %v1475, %v1490
        %v1492 = vld [vmem:[#allocation2] sm:$0xff]
        %s1493 = scalar_lea.vmem %s4, 24
        %v1494 = vld [vmem:[%s1493] sm:$0xf]
        %v1496 = vsel %vm343, %v1491, 0
        %v1499 = vsel %vm423, %v1494, 0
        %1501 = vmatpush.msra.mxu0 0.0
        %1502 = vmatpush.msra.mxu0 0.0
        %1503 = vmatpush.msra.mxu0 0.0
        %1504 = vmatpush.msra.mxu0 0.0
        %1505 = vmatpush.msra.mxu0 0.0
        %1506 = vmatpush.msra.mxu0 0.0
        %1507 = vmatpush.msra.mxu0 0.0
        %1508 = vmatpush.msra.mxu0 0.0
        %1509 = vmatpush.msra.mxu0 0.0
        %1510 = vmatpush.msra.mxu0 0.0
        %1511 = vmatpush.msra.mxu0 0.0
        %1512 = vmatpush.msra.mxu0 0.0
        %1513 = vmatpush.msra.mxu0 0.0
        %1514 = vmatpush.msra.mxu0 0.0
        %1515 = vmatpush.msra.mxu0 0.0
        %1516 = vmatpush.msra.mxu0 %v1499
        %1517 = vmatmul.f32.gmra.mxu0 %v1496
        %v1518 = vpop.f32.mrf.mxu0
        %v1519 = vadd.f32 0.0, %v1518
        %1520 = vdwg.mxu0
        %v1521 = vadd.f32 %v1492, %v1519
        %1522 = vst.msk [vmem:[#allocation2] sm:$0xff] %vm266, %v1521
        %s1523 = scalar_lea.vmem %s1, 224
        %v1524 = vld [vmem:[%s1523] sm:$0xff]
        %v1525 = vld [vmem:[%s1523 + $0x8] sm:$0xff]
        %v1526 = vld [vmem:[%s1523 + $0x10] sm:$0xff]
        %v1527 = vld [vmem:[%s1523 + $0x18] sm:$0xff]
        %1528 = vmatpush.msra.mxu0 0.0
        %1529 = vmatpush.msra.mxu0 0.0
        %1530 = vmatpush.msra.mxu0 0.0
        %1531 = vmatpush.msra.mxu0 0.0
        %1532 = vmatpush.msra.mxu0 0.0
        %1533 = vmatpush.msra.mxu0 0.0
        %1534 = vmatpush.msra.mxu0 0.0
        %1535 = vmatpush.msra.mxu0 0.0
        %1536 = vmatpush.msra.mxu0 0.0
        %1537 = vmatpush.msra.mxu0 0.0
        %1538 = vmatpush.msra.mxu0 0.0
        %1539 = vmatpush.msra.mxu0 0.0
        %1540 = vmatpush.msra.mxu0 %v1527
        %1541 = vmatpush.msra.mxu0 %v1526
        %1542 = vmatpush.msra.mxu0 %v1525
        %1543 = vmatpush.msra.mxu0 %v1524
        %1544 = vmatmul.f32.gmra.mxu0 %v273
        %v1545 = vpop.f32.mrf.mxu0
        %v1546 = vadd.f32 0.0, %v1545
        %1547 = vdwg.mxu0
        %s1548 = scalar_lea.vmem %s2, 224
        %v1549 = vld [vmem:[%s1548] sm:$0xff]
        %v1550 = vld [vmem:[%s1548 + $0x8] sm:$0xff]
        %v1551 = vld [vmem:[%s1548 + $0x10] sm:$0xff]
        %v1552 = vld [vmem:[%s1548 + $0x18] sm:$0xff]
        %1553 = vmatpush.msra.mxu0 0.0
        %1554 = vmatpush.msra.mxu0 0.0
        %1555 = vmatpush.msra.mxu0 0.0
        %1556 = vmatpush.msra.mxu0 0.0
        %1557 = vmatpush.msra.mxu0 0.0
        %1558 = vmatpush.msra.mxu0 0.0
        %1559 = vmatpush.msra.mxu0 0.0
        %1560 = vmatpush.msra.mxu0 0.0
        %1561 = vmatpush.msra.mxu0 0.0
        %1562 = vmatpush.msra.mxu0 0.0
        %1563 = vmatpush.msra.mxu0 0.0
        %1564 = vmatpush.msra.mxu0 0.0
        %1565 = vmatpush.msra.mxu0 %v1552
        %1566 = vmatpush.msra.mxu0 %v1551
        %1567 = vmatpush.msra.mxu0 %v1550
        %1568 = vmatpush.msra.mxu0 %v1549
        %1569 = vmatmul.f32.gmra.mxu0 %v273
        %v1570 = vpop.f32.mrf.mxu0
        %v1571 = vadd.f32 0.0, %v1570
        %1572 = vdwg.mxu0
        %s1573 = scalar_lea.vmem %s3, 224
        %v1574 = vld [vmem:[%s1573] sm:$0xff]
        %v1575 = vld [vmem:[%s1573 + $0x8] sm:$0xff]
        %v1576 = vld [vmem:[%s1573 + $0x10] sm:$0xff]
        %v1577 = vld [vmem:[%s1573 + $0x18] sm:$0xff]
        %1578 = vmatpush.msra.mxu0 0.0
        %1579 = vmatpush.msra.mxu0 0.0
        %1580 = vmatpush.msra.mxu0 0.0
        %1581 = vmatpush.msra.mxu0 0.0
        %1582 = vmatpush.msra.mxu0 0.0
        %1583 = vmatpush.msra.mxu0 0.0
        %1584 = vmatpush.msra.mxu0 0.0
        %1585 = vmatpush.msra.mxu0 0.0
        %1586 = vmatpush.msra.mxu0 0.0
        %1587 = vmatpush.msra.mxu0 0.0
        %1588 = vmatpush.msra.mxu0 0.0
        %1589 = vmatpush.msra.mxu0 0.0
        %1590 = vmatpush.msra.mxu0 %v1577
        %1591 = vmatpush.msra.mxu0 %v1576
        %1592 = vmatpush.msra.mxu0 %v1575
        %1593 = vmatpush.msra.mxu0 %v1574
        %1594 = vmatmul.f32.gmra.mxu0 %v273
        %v1595 = vpop.f32.mrf.mxu0
        %v1596 = vadd.f32 0.0, %v1595
        %1597 = vdwg.mxu0
        %v1599 = vsel %vm343, %v1546, 0
        %v1602 = vsel %vm343, %v1571, 0
        %1604 = vmatpush.xpose.msra.mxu0 0.0
        %1605 = vmatpush.xpose.msra.mxu0 0.0
        %1606 = vmatpush.xpose.msra.mxu0 0.0
        %1607 = vmatpush.xpose.msra.mxu0 0.0
        %1608 = vmatpush.xpose.msra.mxu0 0.0
        %1609 = vmatpush.xpose.msra.mxu0 0.0
        %1610 = vmatpush.xpose.msra.mxu0 0.0
        %1611 = vmatpush.xpose.msra.mxu0 0.0
        %1612 = vmatpush.xpose.msra.mxu0 0.0
        %1613 = vmatpush.xpose.msra.mxu0 0.0
        %1614 = vmatpush.xpose.msra.mxu0 0.0
        %1615 = vmatpush.xpose.msra.mxu0 0.0
        %1616 = vmatpush.xpose.msra.mxu0 0.0
        %1617 = vmatpush.xpose.msra.mxu0 0.0
        %1618 = vmatpush.xpose.msra.mxu0 0.0
        %1619 = vmatpush.xpose.msra.mxu0 %v1602
        %1620 = vmatmul.f32.gmra.mxu0 %v1599
        %v1621 = vpop.f32.mrf.mxu0
        %v1622 = vadd.f32 0.0, %v1621
        %1623 = vdwg.mxu0
        %v1624 = vsel %vm370, %v1622, -inf
        %1625 = vmax.xlane.f32.xlu0 %v1624
        %v1626 = vpop.xlane.xlu0 %1625
        %v1627 = vsub.f32 %v1622, %v1626
        %v1628 = vmul.f32 %v1627, 1.442695
        %v1629 = vpow.pop %v1628
        %v1630 = vsel %vm370, %v1629, 0.0
        %1631 = vadd.xlane.f32.xlu0 %v1630
        %v1632 = vpop.xlane.xlu0 %1631
        %v1634 = vsel %vm370, %v1629, 0
        %1636 = vmatpush.msra.mxu0 0.0
        %1637 = vmatpush.msra.mxu0 0.0
        %1638 = vmatpush.msra.mxu0 0.0
        %1639 = vmatpush.msra.mxu0 0.0
        %1640 = vmatpush.msra.mxu0 0.0
        %1641 = vmatpush.msra.mxu0 0.0
        %1642 = vmatpush.msra.mxu0 0.0
        %1643 = vmatpush.msra.mxu0 0.0
        %1644 = vmatpush.msra.mxu0 0.0
        %1645 = vmatpush.msra.mxu0 0.0
        %1646 = vmatpush.msra.mxu0 0.0
        %1647 = vmatpush.msra.mxu0 0.0
        %1648 = vmatpush.msra.mxu0 0.0
        %1649 = vmatpush.msra.mxu0 0.0
        %1650 = vmatpush.msra.mxu0 0.0
        %1651 = vmatpush.msra.mxu0 %v1596
        %1652 = vmatmul.f32.gmra.mxu0 %v1634
        %v1653 = vpop.f32.mrf.mxu0
        %v1654 = vadd.f32 0.0, %v1653
        %1655 = vdwg.mxu0
        %v1656 = vrcp.pop %v1632
        %v1657 = vmul.f32 %v1632, %v1656
        %v1658 = vsub.f32 1.0, %v1657
        %v1659 = vmul.f32 %v1656, %v1658
        %v1660 = vadd.f32 %v1656, %v1659
        %vm1661 = vweird.f32 %v1632
        %vm1662 = vweird.f32 %v1656
        %vm1663 = vmor %vm1661, %vm1662
        %v1664 = vsel %vm1663, %v1656, %v1660
        %v1665 = vand.u32 2147483647, %v1632
        %vm1666 = vcmp.eq.f32.partialorder %v1665, 8.507059e+37
        %v1667 = vand.u32 %v1632, 2147483648
        %v1668 = vor.u32 1.1754944e-38, %v1667
        %v1669 = vsel %vm1666, %v1668, %v1664
        %v1670 = vmul.f32 %v1654, %v1669
        %v1671 = vld [vmem:[#allocation2] sm:$0xff]
        %s1672 = scalar_lea.vmem %s4, 28
        %v1673 = vld [vmem:[%s1672] sm:$0xf]
        %v1675 = vsel %vm343, %v1670, 0
        %v1678 = vsel %vm423, %v1673, 0
        %1680 = vmatpush.msra.mxu0 0.0
        %1681 = vmatpush.msra.mxu0 0.0
        %1682 = vmatpush.msra.mxu0 0.0
        %1683 = vmatpush.msra.mxu0 0.0
        %1684 = vmatpush.msra.mxu0 0.0
        %1685 = vmatpush.msra.mxu0 0.0
        %1686 = vmatpush.msra.mxu0 0.0
        %1687 = vmatpush.msra.mxu0 0.0
        %1688 = vmatpush.msra.mxu0 0.0
        %1689 = vmatpush.msra.mxu0 0.0
        %1690 = vmatpush.msra.mxu0 0.0
        %1691 = vmatpush.msra.mxu0 0.0
        %1692 = vmatpush.msra.mxu0 0.0
        %1693 = vmatpush.msra.mxu0 0.0
        %1694 = vmatpush.msra.mxu0 0.0
        %1695 = vmatpush.msra.mxu0 %v1678
        %1696 = vmatmul.f32.gmra.mxu0 %v1675
        %v1697 = vpop.f32.mrf.mxu0
        %v1698 = vadd.f32 0.0, %v1697
        %1699 = vdwg.mxu0
        %v1700 = vadd.f32 %v1671, %v1698
        %1701 = vst.msk [vmem:[#allocation2] sm:$0xff] %vm266, %v1700
        %v1702 = vld [vmem:[#allocation2] sm:$0xff]
        %1703 = vst.msk [vmem:[%s256] sm:$0xff] %vm266, %v1702
        %s1704 = sand.u32 %s173, 1
        %s1705 = scalar_lea.sflag [#allocation4], %s1704
        %s1706 = sand.u32 %s173, 1
        %s1707 = smul.addr %s1706, 8
        %s1708 = scalar_lea.vmem [#allocation3], %s1707
        // Predicated region
        $region45: #{tpu_custom_call.1} parent=43 // pred_check
          %p1709 = pneg %p183
        $region46: #{tpu_custom_call.1} parent=43 // pred_check_branch
          %1711 = sbr.rel (%p1709) target = $region48
        $region47: #{tpu_custom_call.1} parent=43 // pred_region
          %1713 = vsyncadd %s1705, 0
          %s1714 = sadd.s32 %s25, %s24
          %s1715 = smul.addr %s1714, 8
          %s1716 = scalar_lea.hbm %s6, %s1715
          %s1718 = sshll.u32 %s1708, 4
          %s1719 = int_to_ptr.vmem [resolvable:$true] %s1718
          %s1720 = sshll.u32 %s1716, 4
          %s1721 = int_to_ptr.hbm [resolvable:$true] %s1720
          %1723 = dma.vmem_to_hbm [thread:$0]  %s1719, 128, %s1721, %s1705
        $region48: #{tpu_custom_call.1} parent=43 // pred_fallthru
          _
      $region44: #{tpu_custom_call.1} parent=5 // pred_fallthru
        _
      %p1724 = scmp.le.s32.totalorder 2, %s15
      // Predicated region
      $region49: #{tpu_custom_call.1} parent=5 // pred_check
        %p1725 = pneg %p1724
      $region50: #{tpu_custom_call.1} parent=5 // pred_check_branch
        %1727 = sbr.rel (%p1725) target = $region52
      $region51: #{tpu_custom_call.1} parent=5 // pred_region
        %s1728 = ssub.s32 %s15, 2
        // Predicated region
        $region53: #{tpu_custom_call.1} parent=51 // pred_check
          %p1729 = pneg %p189
        $region54: #{tpu_custom_call.1} parent=51 // pred_check_branch
          %1731 = sbr.rel (%p1729) target = $region56
        $region55: #{tpu_custom_call.1} parent=51 // pred_region
          %s1732 = sand.u32 %s174, 1
          %s1733 = scalar_lea.sflag [#allocation4], %s1732
          %s1734 = sand.u32 %s174, 1
          %s1735 = smul.addr %s1734, 8
          %s1736 = scalar_lea.vmem [#allocation3], %s1735
          %1738 = dma.done %s1733, 128
        $region56: #{tpu_custom_call.1} parent=51 // pred_fallthru
          _
      $region52: #{tpu_custom_call.1} parent=5 // pred_fallthru
        _
    $region6: #{tpu_custom_call.1} parent=1 // loop_footer
      %s19 = sadd.s32 1, %s15
    $region7: #{tpu_custom_call.1} parent=1 // loop_footer_branch
      %14 = sbr.rel target = $region3
    $region8: #{tpu_custom_call.1} parent=1 // loop_exit
      _
    %1739 = vsyncpa [#allocation4], 1
    %s1740 = scalar_lea.sflag [#allocation4], 1
    %1741 = vsyncpa %s1740, 1

</llo_original>
